<compile_context>
chip_gen: v7x
topology: tpu7x:2x2x1
jax: 0.10.0
libtpu: 0.0.40
codegen_flags: <defaults>
</compile_context>

<pallas_src>
import jax
import jax.numpy as jnp
from jax.experimental import pallas as pl
from jax.experimental.pallas import tpu as pltpu

SIZE = 15
C1, C2, C3 = 256, 64, 16
H1 = SIZE - 6          # 9  (fc input size / conv stack output length)
L1 = SIZE - 2          # 13 (conv1 output length)
LPAD = 16              # per-element row stride inside the kernel (13 padded to 16)
KIN = 3 * 8            # 24 = im2col feature width for conv1

# Circular rolls by up to 2 rows wrap only into the padded tail rows of the
# last element; this requires at least 2 rows of per-element padding.
assert LPAD - L1 >= 2, "taps3/roll correctness requires LPAD - L1 >= 2"


def _round_up(x, m):
    return ((x + m - 1) // m) * m


def cnn_kernel(x_ref,
               w1_ref, b1_ref,
               w2_ref, b2_ref,
               w3_ref, b3_ref,
               w4_ref, b4_ref,
               wfc_ref, bfc_ref,
               o_ref):
    tb = o_ref.shape[0]
    rows = tb * LPAD
    f32 = jnp.float32
    bf16 = jnp.bfloat16

    def shift_rows(z, k):
        # result[r] = z[(r + k) % rows] -- circular sublane roll (XLU op).
        # Wrapped rows land only in padded tail rows (LPAD - L1 >= 2), which
        # are never read by any valid output position.
        return pltpu.roll(z, shift=(rows - k) % rows, axis=0)

    x = x_ref[...]                                                   # (rows, 24) bf16

    # ---- conv1 (im2col, single K=24 matmul) + bn1 (folded) + relu ----
    y1 = jnp.dot(x, w1_ref[...], preferred_element_type=f32) + b1_ref[...]
    y1 = jnp.maximum(y1, 0.0)                                        # (rows, 256) f32

    # ---- conv2 + bn2 (folded) + relu : ONE matmul, taps packed along N ----
    z = jnp.dot(y1.astype(bf16), w2_ref[...],
                preferred_element_type=f32)                          # (rows, 192)
    y2 = (z[:, 0:C2]
          + shift_rows(z[:, C2:2 * C2], 1)
          + shift_rows(z[:, 2 * C2:3 * C2], 2))
    y2 = jnp.maximum(y2 + b2_ref[...], 0.0)                          # (rows, 64) f32

    # ---- conv3 + bn3 (folded) + relu : ONE matmul, taps packed along N ----
    u = jnp.dot(y2.astype(bf16), w3_ref[...],
                preferred_element_type=f32)                          # (rows, 48)
    y3 = (u[:, 0:C3]
          + shift_rows(u[:, C3:2 * C3], 1)
          + shift_rows(u[:, 2 * C3:3 * C3], 2))
    y3 = jnp.maximum(y3 + b3_ref[...], 0.0)                          # (rows, 16) f32

    # ---- conv4 (1x1, single output channel) + relu : lane reduction ----
    y3b = y3.reshape(tb, LPAD, C3)                                   # aligned split
    y4 = jnp.sum(y3b * w4_ref[...], axis=-1, keepdims=True) + b4_ref[...]
    y4 = jnp.maximum(y4, 0.0)                                        # (tb, 16, 1)
    # dropout(p=0) -> identity

    # ---- fc : Linear(9, 2); wfc zero-padded to 16 rows so garbage rows add 0
    out = jnp.sum(y4 * wfc_ref[...], axis=1) + bfc_ref[...]          # (tb, 2)
    o_ref[...] = out


def cnn_forward(x_ncl, params, tb=256):
    """x_ncl: (N, 8, 15) float32 (PyTorch NCL layout).  Returns (N, 2) float32."""
    N = x_ncl.shape[0]
    (w1c, b1p, w2cat, b2p, w3cat, b3p, w4row, b4p, wfc_pad, bfcp) = params

    tb = min(tb, _round_up(N, 8))          # don't over-pad tiny batches
    # v7x: dimension_semantics=("parallel",) only shards across its 2 TCs if
    # there are >= 2 grid steps; shrink tb for small batches rather than
    # collapsing to a single step.
    if _round_up(N, tb) // tb < 2 and tb > 8:
        tb = max(8, _round_up(tb // 2, 8))
    npad = _round_up(N, tb)

    # NCL -> NLC, im2col over L (3 taps concatenated on the channel/lane axis),
    # pad L 13 -> 16 and N -> npad, flatten to (npad*16, 24), cast to bf16.
    x_nlc = jnp.transpose(x_ncl, (0, 2, 1))                          # (N, 15, 8)
    cols = jnp.concatenate(
        [x_nlc[:, k:k + L1, :] for k in range(3)], axis=-1)          # (N, 13, 24)
    cols = jnp.pad(cols, ((0, npad - N), (0, LPAD - L1), (0, 0)))
    x_flat = cols.reshape(npad * LPAD, KIN).astype(jnp.bfloat16)

    full = lambda a: pl.BlockSpec(a.shape, lambda n: (0,) * a.ndim)

    out = pl.pallas_call(
        cnn_kernel,
        out_shape=jax.ShapeDtypeStruct((npad, 2), jnp.float32),
        grid=(npad // tb,),
        in_specs=[
            pl.BlockSpec((tb * LPAD, KIN), lambda n: (n, 0)),        # x (im2col'd)
            full(w1c), full(b1p),
            full(w2cat), full(b2p),
            full(w3cat), full(b3p),
            full(w4row), full(b4p),
            full(wfc_pad), full(bfcp),
        ],
        out_specs=pl.BlockSpec((tb, 2), lambda n: (n, 0)),
        compiler_params=pltpu.CompilerParams(
            dimension_semantics=("parallel",),
            vmem_limit_bytes=48 * 1024 * 1024),
    )(x_flat, w1c, b1p, w2cat, b2p, w3cat, b3p, w4row, b4p, wfc_pad, bfcp)
    return out[:N]


def make_params(key):
    """Deterministic synthetic parameters (PyTorch-shaped), plus kernel-rearranged
    versions with eval-mode BatchNorm folded into the conv weights/biases."""
    ks = jax.random.split(key, 20)
    f32 = jnp.float32
    bf16 = jnp.bfloat16
    # PyTorch shapes: conv1 (256,8,3), conv2 (64,256,3), conv3 (16,64,3),
    # conv4 (1,16,1), fc (2,9).
    w1_t = jax.random.normal(ks[0], (C1, 8, 3), f32) * 0.1
    b1c = jax.random.normal(ks[1], (C1,), f32) * 0.1
    w2_t = jax.random.normal(ks[2], (C2, C1, 3), f32) * 0.05
    b2c = jax.random.normal(ks[3], (C2,), f32) * 0.1
    w3_t = jax.random.normal(ks[4], (C3, C2, 3), f32) * 0.05
    b3c = jax.random.normal(ks[5], (C3,), f32) * 0.1
    w4_t = jax.random.normal(ks[6], (1, C3, 1), f32) * 0.1
    b4c = jax.random.normal(ks[7], (1,), f32) * 0.1
    wfc_t = jax.random.normal(ks[8], (2, H1), f32) * 0.1
    bfc_c = jax.random.normal(ks[9], (2,), f32) * 0.1

    # BatchNorm1d (eval mode) params + running stats -> per-channel affine.
    def bn(kg, kb, km, kv, c):
        gamma = 1.0 + 0.1 * jax.random.normal(kg, (c,), f32)
        beta = 0.1 * jax.random.normal(kb, (c,), f32)
        mean = 0.1 * jax.random.normal(km, (c,), f32)
        var = jnp.abs(jax.random.normal(kv, (c,), f32)) + 0.5
        eps = 1e-5
        scale = gamma / jnp.sqrt(var + eps)
        shift = beta - mean * scale
        return scale, shift

    s1, t1 = bn(ks[10], ks[11], ks[12], ks[13], C1)
    s2, t2 = bn(ks[14], ks[15], ks[16], ks[17], C2)
    s3, t3 = bn(ks[18], ks[19], ks[0], ks[1], C3)

    # ---- fold BN into conv weights/biases and rearrange for the kernel ----
    # conv1 as im2col weight: (K*Cin, Cout), row index = k*8 + cin.
    w1_kic = jnp.transpose(w1_t, (2, 1, 0))                          # (3, 8, 256)
    w1c = (w1_kic * s1[None, None, :]).reshape(KIN, C1).astype(bf16) # (24, 256)
    b1p = (b1c * s1 + t1).reshape(1, C1)

    # conv2/conv3: taps concatenated along the output (N) axis -> single matmul.
    w2_kic = jnp.transpose(w2_t, (2, 1, 0)) * s2[None, None, :]      # (3, 256, 64)
    w2cat = jnp.concatenate([w2_kic[0], w2_kic[1], w2_kic[2]],
                            axis=1).astype(bf16)                     # (256, 192)
    b2p = (b2c * s2 + t2).reshape(1, C2)

    w3_kic = jnp.transpose(w3_t, (2, 1, 0)) * s3[None, None, :]      # (3, 64, 16)
    w3cat = jnp.concatenate([w3_kic[0], w3_kic[1], w3_kic[2]],
                            axis=1).astype(bf16)                     # (64, 48)
    b3p = (b3c * s3 + t3).reshape(1, C3)

    w4row = w4_t[:, :, 0].reshape(1, 1, C3)                          # (1, 1, 16) f32
    b4p = b4c.reshape(1, 1, 1)

    wfc_pad = jnp.zeros((LPAD, 2), f32).at[:H1, :].set(jnp.transpose(wfc_t))  # (16, 2)
    bfcp = bfc_c.reshape(1, 2)

    kernel_params = (w1c, b1p, w2cat, b2p, w3cat, b3p, w4row, b4p, wfc_pad, bfcp)
    torch_params = (w1_t, b1c, w2_t, b2c, w3_t, b3c, w4_t, b4c, wfc_t, bfc_c,
                    s1, t1, s2, t2, s3, t3)
    return kernel_params, torch_params


def ref_forward(x_ncl, torch_params):
    """Pure-JAX reference mirroring the PyTorch forward (NCL layout, eval-mode BN)."""
    (w1, b1, w2, b2, w3, b3, w4, b4, wfc, bfc, s1, t1, s2, t2, s3, t3) = torch_params

    def conv1d(x, w, b):
        y = jax.lax.conv_general_dilated(
            x, w, window_strides=(1,), padding='VALID',
            dimension_numbers=('NCH', 'OIH', 'NCH'))
        return y + b[None, :, None]

    def bn(x, scale, shift):
        return x * scale[None, :, None] + shift[None, :, None]

    x = jnp.maximum(bn(conv1d(x_ncl, w1, b1), s1, t1), 0.0)
    x = jnp.maximum(bn(conv1d(x, w2, b2), s2, t2), 0.0)
    x = jnp.maximum(bn(conv1d(x, w3, b3), s3, t3), 0.0)
    x = jnp.maximum(conv1d(x, w4, b4), 0.0)          # (N, 1, 9)
    x = x.reshape(-1, H1)
    return x @ wfc.T + bfc[None, :]


if __name__ == "__main__":
    key = jax.random.PRNGKey(0)
    kp, kx = jax.random.split(key)
    kernel_params, torch_params = make_params(kp)

    N = 2
    x_ncl = jax.random.normal(kx, (N, 8, SIZE), jnp.float32)   # PyTorch layout (N, C=8, L=15)

    out = jax.block_until_ready(cnn_forward(x_ncl, kernel_params))
    ref = jax.block_until_ready(ref_forward(x_ncl, torch_params))

    assert out.shape == (N, 2), out.shape
    # bf16 matmul operands (f32 accumulation) -> relaxed tolerance vs f32 reference.
    assert jnp.allclose(out, ref, rtol=2e-2, atol=2e-2), (out, ref)
    print("KERNEL_OK")
</pallas_src>

<mosaic_0001>
module attributes {stable_mosaic.version = 11 : i64} {
  func.func @cnn_kernel(%arg0: i32, %arg1: memref<128x24xbf16, #tpu.memory_space<vmem>>, %arg2: memref<24x256xbf16, #tpu.memory_space<vmem>>, %arg3: memref<1x256xf32, #tpu.memory_space<vmem>>, %arg4: memref<256x192xbf16, #tpu.memory_space<vmem>>, %arg5: memref<1x64xf32, #tpu.memory_space<vmem>>, %arg6: memref<64x48xbf16, #tpu.memory_space<vmem>>, %arg7: memref<1x16xf32, #tpu.memory_space<vmem>>, %arg8: memref<1x1x16xf32, #tpu.memory_space<vmem>>, %arg9: memref<1x1x1xf32, #tpu.memory_space<vmem>>, %arg10: memref<16x2xf32, #tpu.memory_space<vmem>>, %arg11: memref<1x2xf32, #tpu.memory_space<vmem>>, %arg12: memref<8x2xf32, #tpu.memory_space<vmem>>) attributes {dimension_semantics = [#tpu.dimension_semantics<parallel>], iteration_bounds = array<i64: 1>, scalar_prefetch = 0 : i64, scratch_operands = 0 : i64, tpu.core_type = #tpu.core_type<tc>, window_params = [{transform_indices = @transform_0, window_bounds = array<i64: 128, 24>}, {pipeline_mode = #tpu.pipeline_mode<synchronous>, transform_indices = @transform_1, window_bounds = array<i64: 24, 256>}, {pipeline_mode = #tpu.pipeline_mode<synchronous>, transform_indices = @transform_2, window_bounds = array<i64: 1, 256>}, {pipeline_mode = #tpu.pipeline_mode<synchronous>, transform_indices = @transform_3, window_bounds = array<i64: 256, 192>}, {pipeline_mode = #tpu.pipeline_mode<synchronous>, transform_indices = @transform_4, window_bounds = array<i64: 1, 64>}, {pipeline_mode = #tpu.pipeline_mode<synchronous>, transform_indices = @transform_5, window_bounds = array<i64: 64, 48>}, {pipeline_mode = #tpu.pipeline_mode<synchronous>, transform_indices = @transform_6, window_bounds = array<i64: 1, 16>}, {pipeline_mode = #tpu.pipeline_mode<synchronous>, transform_indices = @transform_7, window_bounds = array<i64: 1, 1, 16>}, {pipeline_mode = #tpu.pipeline_mode<synchronous>, transform_indices = @transform_8, window_bounds = array<i64: 1, 1, 1>}, {pipeline_mode = #tpu.pipeline_mode<synchronous>, transform_indices = @transform_9, window_bounds = array<i64: 16, 2>}, {pipeline_mode = #tpu.pipeline_mode<synchronous>, transform_indices = @transform_10, window_bounds = array<i64: 1, 2>}, {transform_indices = @transform_11, window_bounds = array<i64: 8, 2>}]} {
    %c0 = arith.constant 0 : index
    %c0_0 = arith.constant 0 : index
    %0 = vector.load %arg1[%c0, %c0_0] : memref<128x24xbf16, #tpu.memory_space<vmem>>, vector<128x24xbf16>
    %c0_1 = arith.constant 0 : index
    %c0_2 = arith.constant 0 : index
    %1 = vector.load %arg2[%c0_1, %c0_2] : memref<24x256xbf16, #tpu.memory_space<vmem>>, vector<24x256xbf16>
    %cst = arith.constant dense<0.000000e+00> : vector<128x256xf32>
    %2 = tpu.matmul %0, %1, %cst {dimension_numbers = #tpu.dot_dimension_numbers<[1], [0], [0], [1], [0, 0, 1, 1], [], []>} : vector<128x24xbf16>, vector<24x256xbf16>, vector<128x256xf32> -> vector<128x256xf32>
    %c0_3 = arith.constant 0 : index
    %c0_4 = arith.constant 0 : index
    %3 = vector.load %arg3[%c0_3, %c0_4] : memref<1x256xf32, #tpu.memory_space<vmem>>, vector<1x256xf32>
    %4 = vector.broadcast %3 : vector<1x256xf32> to vector<128x256xf32>
    %5 = arith.addf %2, %4 : vector<128x256xf32>
    %cst_5 = arith.constant 0.000000e+00 : f32
    %6 = vector.broadcast %cst_5 : f32 to vector<128x256xf32>
    %7 = arith.maximumf %5, %6 : vector<128x256xf32>
    %8 = arith.truncf %7 : vector<128x256xf32> to vector<128x256xbf16>
    %c0_6 = arith.constant 0 : index
    %c0_7 = arith.constant 0 : index
    %9 = vector.load %arg4[%c0_6, %c0_7] : memref<256x192xbf16, #tpu.memory_space<vmem>>, vector<256x192xbf16>
    %cst_8 = arith.constant dense<0.000000e+00> : vector<128x192xf32>
    %10 = tpu.matmul %8, %9, %cst_8 {dimension_numbers = #tpu.dot_dimension_numbers<[1], [0], [0], [1], [0, 0, 1, 1], [], []>} : vector<128x256xbf16>, vector<256x192xbf16>, vector<128x192xf32> -> vector<128x192xf32>
    %11 = vector.extract_strided_slice %10 {offsets = [0, 0], sizes = [128, 64], strides = [1, 1]} : vector<128x192xf32> to vector<128x64xf32>
    %12 = vector.extract_strided_slice %10 {offsets = [0, 64], sizes = [128, 64], strides = [1, 1]} : vector<128x192xf32> to vector<128x64xf32>
    %c127_i32 = arith.constant 127 : i32
    %13 = tpu.dynamic_rotate %12 by %c127_i32 dim 0 : vector<128x64xf32>, i32 -> vector<128x64xf32>
    %14 = arith.addf %11, %13 : vector<128x64xf32>
    %15 = vector.extract_strided_slice %10 {offsets = [0, 128], sizes = [128, 64], strides = [1, 1]} : vector<128x192xf32> to vector<128x64xf32>
    %c126_i32 = arith.constant 126 : i32
    %16 = tpu.dynamic_rotate %15 by %c126_i32 dim 0 : vector<128x64xf32>, i32 -> vector<128x64xf32>
    %17 = arith.addf %14, %16 : vector<128x64xf32>
    %c0_9 = arith.constant 0 : index
    %c0_10 = arith.constant 0 : index
    %18 = vector.load %arg5[%c0_9, %c0_10] : memref<1x64xf32, #tpu.memory_space<vmem>>, vector<1x64xf32>
    %19 = vector.broadcast %18 : vector<1x64xf32> to vector<128x64xf32>
    %20 = arith.addf %17, %19 : vector<128x64xf32>
    %cst_11 = arith.constant 0.000000e+00 : f32
    %21 = vector.broadcast %cst_11 : f32 to vector<128x64xf32>
    %22 = arith.maximumf %20, %21 : vector<128x64xf32>
    %23 = arith.truncf %22 : vector<128x64xf32> to vector<128x64xbf16>
    %c0_12 = arith.constant 0 : index
    %c0_13 = arith.constant 0 : index
    %24 = vector.load %arg6[%c0_12, %c0_13] : memref<64x48xbf16, #tpu.memory_space<vmem>>, vector<64x48xbf16>
    %cst_14 = arith.constant dense<0.000000e+00> : vector<128x48xf32>
    %25 = tpu.matmul %23, %24, %cst_14 {dimension_numbers = #tpu.dot_dimension_numbers<[1], [0], [0], [1], [0, 0, 1, 1], [], []>} : vector<128x64xbf16>, vector<64x48xbf16>, vector<128x48xf32> -> vector<128x48xf32>
    %26 = vector.extract_strided_slice %25 {offsets = [0, 0], sizes = [128, 16], strides = [1, 1]} : vector<128x48xf32> to vector<128x16xf32>
    %27 = vector.extract_strided_slice %25 {offsets = [0, 16], sizes = [128, 16], strides = [1, 1]} : vector<128x48xf32> to vector<128x16xf32>
    %c127_i32_15 = arith.constant 127 : i32
    %28 = tpu.dynamic_rotate %27 by %c127_i32_15 dim 0 : vector<128x16xf32>, i32 -> vector<128x16xf32>
    %29 = arith.addf %26, %28 : vector<128x16xf32>
    %30 = vector.extract_strided_slice %25 {offsets = [0, 32], sizes = [128, 16], strides = [1, 1]} : vector<128x48xf32> to vector<128x16xf32>
    %c126_i32_16 = arith.constant 126 : i32
    %31 = tpu.dynamic_rotate %30 by %c126_i32_16 dim 0 : vector<128x16xf32>, i32 -> vector<128x16xf32>
    %32 = arith.addf %29, %31 : vector<128x16xf32>
    %c0_17 = arith.constant 0 : index
    %c0_18 = arith.constant 0 : index
    %33 = vector.load %arg7[%c0_17, %c0_18] : memref<1x16xf32, #tpu.memory_space<vmem>>, vector<1x16xf32>
    %34 = vector.broadcast %33 : vector<1x16xf32> to vector<128x16xf32>
    %35 = arith.addf %32, %34 : vector<128x16xf32>
    %cst_19 = arith.constant 0.000000e+00 : f32
    %36 = vector.broadcast %cst_19 : f32 to vector<128x16xf32>
    %37 = arith.maximumf %35, %36 : vector<128x16xf32>
    %38 = vector.shape_cast %37 : vector<128x16xf32> to vector<8x16x16xf32>
    %c0_20 = arith.constant 0 : index
    %c0_21 = arith.constant 0 : index
    %c0_22 = arith.constant 0 : index
    %39 = vector.load %arg8[%c0_20, %c0_21, %c0_22] : memref<1x1x16xf32, #tpu.memory_space<vmem>>, vector<1x1x16xf32>
    %40 = vector.broadcast %39 : vector<1x1x16xf32> to vector<8x16x16xf32>
    %41 = arith.mulf %38, %40 : vector<8x16x16xf32>
    %cst_23 = arith.constant dense<0.000000e+00> : vector<8x16xf32>
    %42 = vector.multi_reduction <add>, %41, %cst_23 [2] : vector<8x16x16xf32> to vector<8x16xf32>
    %43 = vector.shape_cast %42 : vector<8x16xf32> to vector<8x16x1xf32>
    %c0_24 = arith.constant 0 : index
    %c0_25 = arith.constant 0 : index
    %c0_26 = arith.constant 0 : index
    %44 = vector.load %arg9[%c0_24, %c0_25, %c0_26] : memref<1x1x1xf32, #tpu.memory_space<vmem>>, vector<1x1x1xf32>
    %45 = vector.broadcast %44 : vector<1x1x1xf32> to vector<8x16x1xf32>
    %46 = arith.addf %43, %45 : vector<8x16x1xf32>
    %cst_27 = arith.constant 0.000000e+00 : f32
    %47 = vector.broadcast %cst_27 : f32 to vector<8x16x1xf32>
    %48 = arith.maximumf %46, %47 : vector<8x16x1xf32>
    %c0_28 = arith.constant 0 : index
    %c0_29 = arith.constant 0 : index
    %49 = vector.load %arg10[%c0_28, %c0_29] : memref<16x2xf32, #tpu.memory_space<vmem>>, vector<16x2xf32>
    %50 = vector.shape_cast %49 : vector<16x2xf32> to vector<1x16x2xf32>
    %51 = vector.broadcast %48 : vector<8x16x1xf32> to vector<8x16x2xf32>
    %52 = vector.broadcast %50 : vector<1x16x2xf32> to vector<8x16x2xf32>
    %53 = arith.mulf %51, %52 : vector<8x16x2xf32>
    %cst_30 = arith.constant dense<0.000000e+00> : vector<8x2xf32>
    %54 = vector.multi_reduction <add>, %53, %cst_30 [1] : vector<8x16x2xf32> to vector<8x2xf32>
    %c0_31 = arith.constant 0 : index
    %c0_32 = arith.constant 0 : index
    %55 = vector.load %arg11[%c0_31, %c0_32] : memref<1x2xf32, #tpu.memory_space<vmem>>, vector<1x2xf32>
    %56 = vector.broadcast %55 : vector<1x2xf32> to vector<8x2xf32>
    %57 = arith.addf %54, %56 : vector<8x2xf32>
    %c0_33 = arith.constant 0 : index
    %c0_34 = arith.constant 0 : index
    %58 = vector.load %arg12[%c0_33, %c0_34] : memref<8x2xf32, #tpu.memory_space<vmem>>, vector<8x2xf32>
    tpu.vector_store %arg12[%c0_33, %c0_34], %57 {strides = array<i32>} : memref<8x2xf32, #tpu.memory_space<vmem>>, vector<8x2xf32>,
    return
  }
  func.func @transform_0(%arg0: i32) -> (i32, i32) {
    %c0_i32 = arith.constant 0 : i32
    %c0_i32_0 = arith.constant 0 : i32
    return %arg0, %c0_i32 : i32, i32
  }
  func.func @transform_1(%arg0: i32) -> (i32, i32) {
    %c0_i32 = arith.constant 0 : i32
    %c0_i32_0 = arith.constant 0 : i32
    %c0_i32_1 = arith.constant 0 : i32
    return %c0_i32, %c0_i32_0 : i32, i32
  }
  func.func @transform_2(%arg0: i32) -> (i32, i32) {
    %c0_i32 = arith.constant 0 : i32
    %c0_i32_0 = arith.constant 0 : i32
    %c0_i32_1 = arith.constant 0 : i32
    return %c0_i32, %c0_i32_0 : i32, i32
  }
  func.func @transform_3(%arg0: i32) -> (i32, i32) {
    %c0_i32 = arith.constant 0 : i32
    %c0_i32_0 = arith.constant 0 : i32
    %c0_i32_1 = arith.constant 0 : i32
    return %c0_i32, %c0_i32_0 : i32, i32
  }
  func.func @transform_4(%arg0: i32) -> (i32, i32) {
    %c0_i32 = arith.constant 0 : i32
    %c0_i32_0 = arith.constant 0 : i32
    %c0_i32_1 = arith.constant 0 : i32
    return %c0_i32, %c0_i32_0 : i32, i32
  }
  func.func @transform_5(%arg0: i32) -> (i32, i32) {
    %c0_i32 = arith.constant 0 : i32
    %c0_i32_0 = arith.constant 0 : i32
    %c0_i32_1 = arith.constant 0 : i32
    return %c0_i32, %c0_i32_0 : i32, i32
  }
  func.func @transform_6(%arg0: i32) -> (i32, i32) {
    %c0_i32 = arith.constant 0 : i32
    %c0_i32_0 = arith.constant 0 : i32
    %c0_i32_1 = arith.constant 0 : i32
    return %c0_i32, %c0_i32_0 : i32, i32
  }
  func.func @transform_7(%arg0: i32) -> (i32, i32, i32) {
    %c0_i32 = arith.constant 0 : i32
    %c0_i32_0 = arith.constant 0 : i32
    %c0_i32_1 = arith.constant 0 : i32
    %c0_i32_2 = arith.constant 0 : i32
    return %c0_i32, %c0_i32_0, %c0_i32_1 : i32, i32, i32
  }
  func.func @transform_8(%arg0: i32) -> (i32, i32, i32) {
    %c0_i32 = arith.constant 0 : i32
    %c0_i32_0 = arith.constant 0 : i32
    %c0_i32_1 = arith.constant 0 : i32
    %c0_i32_2 = arith.constant 0 : i32
    return %c0_i32, %c0_i32_0, %c0_i32_1 : i32, i32, i32
  }
  func.func @transform_9(%arg0: i32) -> (i32, i32) {
    %c0_i32 = arith.constant 0 : i32
    %c0_i32_0 = arith.constant 0 : i32
    %c0_i32_1 = arith.constant 0 : i32
    return %c0_i32, %c0_i32_0 : i32, i32
  }
  func.func @transform_10(%arg0: i32) -> (i32, i32) {
    %c0_i32 = arith.constant 0 : i32
    %c0_i32_0 = arith.constant 0 : i32
    %c0_i32_1 = arith.constant 0 : i32
    return %c0_i32, %c0_i32_0 : i32, i32
  }
  func.func @transform_11(%arg0: i32) -> (i32, i32) {
    %c0_i32 = arith.constant 0 : i32
    %c0_i32_0 = arith.constant 0 : i32
    return %arg0, %c0_i32 : i32, i32
  }
}

</mosaic_0001>

<llo_original>
// kernel: tpu_custom_call.1
$region0: #{tpu_custom_call.1}
  #allocation0 [shape = 'u32[]', space=smem, size = 0x4, offset = 0x4, fixed_abs, tag = 'smem constant byte address 0x4 - core index']
  #allocation1 [shape = 'u32[144,128]{1,0:T(1,128)}', space=vmem, size = 0x12000, scoped, tag = 'internal scratch']
  #allocation2 [shape = 'f32[1,1,1]{2,1,0:T(1,128)S(1)}', space=vmem, size = 0x200, scoped, tag = 'scoped memory for tpu_custom_call.1']
  %s0 = inlined_call_operand.vmem [shape: bf16[128,24], index: 0, kind: input, shape index: {}]
  %s1 = inlined_call_operand.vmem [shape: bf16[24,256], index: 1, kind: input, shape index: {}]
  %s2 = inlined_call_operand.vmem [shape: f32[1,256], index: 2, kind: input, shape index: {}]
  %s3 = inlined_call_operand.vmem [shape: bf16[256,192], index: 3, kind: input, shape index: {}]
  %s4 = inlined_call_operand.vmem [shape: f32[1,64], index: 4, kind: input, shape index: {}]
  %s5 = inlined_call_operand.vmem [shape: bf16[64,48], index: 5, kind: input, shape index: {}]
  %s6 = inlined_call_operand.vmem [shape: f32[1,16], index: 6, kind: input, shape index: {}]
  %s7 = inlined_call_operand.vmem [shape: f32[1,1,16], index: 7, kind: input, shape index: {}]
  %s8 = inlined_call_operand.<no memory space> [shape: f32[1,1,1], index: 8, kind: input, shape index: {}]
  %s9 = inlined_call_operand.vmem [shape: f32[16,2], index: 9, kind: input, shape index: {}]
  %s10 = inlined_call_operand.vmem [shape: f32[1,2], index: 10, kind: input, shape index: {}]
  %s11 = inlined_call_operand.vmem [shape: f32[8,2], index: 11, kind: output, shape index: {}]
  %s12 = sld [smem:[#allocation0]]
  $region54: #{tpu_custom_call.1} parent=0
    _
  %s14 = ssub.s32 1, %s12
  %s15 = scalar_select 0, %s14, %s12
  %v16 = vstv %s8
  %17 = vst [vmem:[#allocation2] sm:$0x1] %v16
  // Predicated region
  $region2: #{tpu_custom_call.1} parent=0 // pred_check
    _
  $region3: #{tpu_custom_call.1} parent=0 // pred_check_branch
    %19 = sbr.rel (0) target = $region5
  $region4: #{tpu_custom_call.1} parent=0 // pred_region
    _
  $region5: #{tpu_custom_call.1} parent=0 // pred_fallthru
    _
  // Predicated region
  $region6: #{tpu_custom_call.1} parent=0 // pred_check
    _
  $region7: #{tpu_custom_call.1} parent=0 // pred_check_branch
    %21 = sbr.rel (0) target = $region9
  $region8: #{tpu_custom_call.1} parent=0 // pred_region
    _
  $region9: #{tpu_custom_call.1} parent=0 // pred_fallthru
    _
  // Predicated region
  $region10: #{tpu_custom_call.1} parent=0 // pred_check
    _
  $region11: #{tpu_custom_call.1} parent=0 // pred_check_branch
    %23 = sbr.rel (0) target = $region13
  $region12: #{tpu_custom_call.1} parent=0 // pred_region
    _
  $region13: #{tpu_custom_call.1} parent=0 // pred_fallthru
    _
  // Predicated region
  $region14: #{tpu_custom_call.1} parent=0 // pred_check
    _
  $region15: #{tpu_custom_call.1} parent=0 // pred_check_branch
    %25 = sbr.rel (0) target = $region17
  $region16: #{tpu_custom_call.1} parent=0 // pred_region
    _
  $region17: #{tpu_custom_call.1} parent=0 // pred_fallthru
    _
  // Predicated region
  $region18: #{tpu_custom_call.1} parent=0 // pred_check
    _
  $region19: #{tpu_custom_call.1} parent=0 // pred_check_branch
    %27 = sbr.rel (0) target = $region21
  $region20: #{tpu_custom_call.1} parent=0 // pred_region
    _
  $region21: #{tpu_custom_call.1} parent=0 // pred_fallthru
    _
  // Predicated region
  $region22: #{tpu_custom_call.1} parent=0 // pred_check
    _
  $region23: #{tpu_custom_call.1} parent=0 // pred_check_branch
    %29 = sbr.rel (0) target = $region25
  $region24: #{tpu_custom_call.1} parent=0 // pred_region
    _
  $region25: #{tpu_custom_call.1} parent=0 // pred_fallthru
    _
  // Predicated region
  $region26: #{tpu_custom_call.1} parent=0 // pred_check
    _
  $region27: #{tpu_custom_call.1} parent=0 // pred_check_branch
    %31 = sbr.rel (0) target = $region29
  $region28: #{tpu_custom_call.1} parent=0 // pred_region
    _
  $region29: #{tpu_custom_call.1} parent=0 // pred_fallthru
    _
  // Predicated region
  $region30: #{tpu_custom_call.1} parent=0 // pred_check
    _
  $region31: #{tpu_custom_call.1} parent=0 // pred_check_branch
    %33 = sbr.rel (0) target = $region33
  $region32: #{tpu_custom_call.1} parent=0 // pred_region
    _
  $region33: #{tpu_custom_call.1} parent=0 // pred_fallthru
    _
  // Predicated region
  $region34: #{tpu_custom_call.1} parent=0 // pred_check
    _
  $region35: #{tpu_custom_call.1} parent=0 // pred_check_branch
    %35 = sbr.rel (0) target = $region37
  $region36: #{tpu_custom_call.1} parent=0 // pred_region
    _
  $region37: #{tpu_custom_call.1} parent=0 // pred_fallthru
    _
  // Predicated region
  $region38: #{tpu_custom_call.1} parent=0 // pred_check
    _
  $region39: #{tpu_custom_call.1} parent=0 // pred_check_branch
    %37 = sbr.rel (0) target = $region41
  $region40: #{tpu_custom_call.1} parent=0 // pred_region
    _
  $region41: #{tpu_custom_call.1} parent=0 // pred_fallthru
    _
  // Predicated region
  $region42: #{tpu_custom_call.1} parent=0 // pred_check
    _
  $region43: #{tpu_custom_call.1} parent=0 // pred_check_branch
    %39 = sbr.rel (0) target = $region45
  $region44: #{tpu_custom_call.1} parent=0 // pred_region
    _
  $region45: #{tpu_custom_call.1} parent=0 // pred_fallthru
    _
  %v41 = vld [vmem:[%s0] sm:$0xf]
  %v42 = vld [vmem:[%s0 + $0x4] sm:$0xf]
  %v43 = vld [vmem:[%s0 + $0x8] sm:$0xf]
  %v44 = vld [vmem:[%s0 + $0xc] sm:$0xf]
  %v45 = vld [vmem:[%s0 + $0x10] sm:$0xf]
  %v46 = vld [vmem:[%s0 + $0x14] sm:$0xf]
  %v47 = vld [vmem:[%s0 + $0x18] sm:$0xf]
  %v48 = vld [vmem:[%s0 + $0x1c] sm:$0xf]
  %v49 = vld [vmem:[%s0 + $0x20] sm:$0xf]
  %v50 = vld [vmem:[%s0 + $0x24] sm:$0xf]
  %v51 = vld [vmem:[%s0 + $0x28] sm:$0xf]
  %v52 = vld [vmem:[%s0 + $0x2c] sm:$0xf]
  %v53 = vld [vmem:[%s0 + $0x30] sm:$0xf]
  %v54 = vld [vmem:[%s0 + $0x34] sm:$0xf]
  %v55 = vld [vmem:[%s0 + $0x38] sm:$0xf]
  %v56 = vld [vmem:[%s0 + $0x3c] sm:$0xf]
  %v57 = vld [vmem:[%s1] sm:$0xff]
  %v58 = vld [vmem:[%s1 + $0x8] sm:$0xff]
  %v59 = vld [vmem:[%s1 + $0x10] sm:$0xff]
  %v60 = vld [vmem:[%s2] sm:$0x3]
  %v62 = vlaneseq
  %v63 = vshrl.u32 %v62, 7
  %v64 = vsub.s32 0, %v63
  %v65 = vrot.slane %v60, %v64
  %v66 = vlaneseq
  %v67 = vshrl.u32 %v66, 7
  %v68 = vsub.s32 1, %v67
  %v69 = vrot.slane %v60, %v68
  %v88 = vunpack.c.l.b16 %v41
  %v89 = vunpack.c.l.b16 %v42
  %v90 = vunpack.c.l.b16 %v43
  %v91 = vunpack.c.l.b16 %v44
  %v92 = vunpack.c.l.b16 %v45
  %v93 = vunpack.c.l.b16 %v46
  %v94 = vunpack.c.l.b16 %v47
  %v95 = vunpack.c.l.b16 %v48
  %v96 = vunpack.c.l.b16 %v49
  %v97 = vunpack.c.l.b16 %v50
  %v98 = vunpack.c.l.b16 %v51
  %v99 = vunpack.c.l.b16 %v52
  %v100 = vunpack.c.l.b16 %v53
  %v101 = vunpack.c.l.b16 %v54
  %v102 = vunpack.c.l.b16 %v55
  %v103 = vunpack.c.l.b16 %v56
  %v104 = vpack.c.b16 %v89, %v88
  %v105 = vpack.c.b16 %v91, %v90
  %v106 = vpack.c.b16 %v93, %v92
  %v107 = vpack.c.b16 %v95, %v94
  %v108 = vpack.c.b16 %v97, %v96
  %v109 = vpack.c.b16 %v99, %v98
  %v110 = vpack.c.b16 %v101, %v100
  %v111 = vpack.c.b16 %v103, %v102
  %v115 = vunpack.c.l.b16 %v57
  %v116 = vunpack.c.h.b16 %v57
  %v117 = vunpack.c.l.b16 %v58
  %v118 = vunpack.c.h.b16 %v58
  %v119 = vunpack.c.l.b16 %v59
  %v120 = vunpack.c.h.b16 %v59
  %v121 = vpack.c.b16 %v117, %v115
  %v122 = vpack.c.b16 %v118, %v116
  %v123 = vpack.c.b16 %v119, %v119
  %v124 = vpack.c.b16 %v120, %v120
  %vm127 = vcmask 195584
  %v129 = vsel %vm127, %v104, 0
  %v132 = vsel %vm127, %v105, 0
  %v135 = vsel %vm127, %v106, 0
  %v138 = vsel %vm127, %v107, 0
  %v141 = vsel %vm127, %v108, 0
  %v144 = vsel %vm127, %v109, 0
  %v147 = vsel %vm127, %v110, 0
  %v150 = vsel %vm127, %v111, 0
  %vm152 = vcmask 1043456
  %v154 = vsel %vm152, %v123, 0
  %v157 = vsel %vm152, %v124, 0
  %159 = vmatprep.subr.bf16.mxu0 %v122
  %160 = vmatpush1.bf16.msra.mxu0 %v121
  %161 = vmatprep.subr.bf16.mxu0 %v157
  %162 = vmatpush1.bf16.msra.mxu0 %v154
  %163 = vmatprep.subr.bf16.mxu0 0
  %164 = vmatpush1.bf16.msra.mxu0 0
  %165 = vmatprep.subr.bf16.mxu0 0
  %166 = vmatpush1.bf16.msra.mxu0 0
  %167 = vmatprep.subr.bf16.mxu0 0
  %168 = vmatpush1.bf16.msra.mxu0 0
  %169 = vmatprep.subr.bf16.mxu0 0
  %170 = vmatpush1.bf16.msra.mxu0 0
  %171 = vmatprep.subr.bf16.mxu0 0
  %172 = vmatpush1.bf16.msra.mxu0 0
  %173 = vmatprep.subr.bf16.mxu0 0
  %174 = vmatpush1.bf16.msra.mxu0 0
  %175 = vmatprep.subr.bf16.mxu0 0
  %176 = vmatpush1.bf16.msra.mxu0 0
  %177 = vmatprep.subr.bf16.mxu0 0
  %178 = vmatpush1.bf16.msra.mxu0 0
  %179 = vmatprep.subr.bf16.mxu0 0
  %180 = vmatpush1.bf16.msra.mxu0 0
  %181 = vmatprep.subr.bf16.mxu0 0
  %182 = vmatpush1.bf16.msra.mxu0 0
  %183 = vmatprep.subr.bf16.mxu0 0
  %184 = vmatpush1.bf16.msra.mxu0 0
  %185 = vmatprep.subr.bf16.mxu0 0
  %186 = vmatpush1.bf16.msra.mxu0 0
  %187 = vmatprep.subr.bf16.mxu0 0
  %188 = vmatpush1.bf16.msra.mxu0 0
  %189 = vmatprep.subr.bf16.mxu0 0
  %190 = vmatpush1.bf16.msra.mxu0 0
  %191 = vmatprep.mubr.bf16.mxu0 0
  %192 = vmatmul.mubr.bf16.gmra.mrb[0].mxu0 %v129
  %v193 = vpop.f32.mrb[0].mxu0
  %v194 = vadd.f32 %v65, %v193
  %v195 = vpop.f32.mrb[0].mxu0
  %v196 = vadd.f32 %v69, %v195
  %v197 = vpop.f32.mrb[0].mxu0
  %v198 = vadd.f32 %v65, %v197
  %v199 = vpop.f32.mrb[0].mxu0
  %v200 = vadd.f32 %v69, %v199
  %201 = vmatprep.mubr.bf16.mxu0 0
  %202 = vmatmul.mubr.bf16.gmra.mrb[0].mxu0 %v132
  %v203 = vpop.f32.mrb[0].mxu0
  %v204 = vadd.f32 %v65, %v203
  %v205 = vpop.f32.mrb[0].mxu0
  %v206 = vadd.f32 %v69, %v205
  %v207 = vpop.f32.mrb[0].mxu0
  %v208 = vadd.f32 %v65, %v207
  %v209 = vpop.f32.mrb[0].mxu0
  %v210 = vadd.f32 %v69, %v209
  %211 = vmatprep.mubr.bf16.mxu0 0
  %212 = vmatmul.mubr.bf16.gmra.mrb[0].mxu0 %v135
  %v213 = vpop.f32.mrb[0].mxu0
  %v214 = vadd.f32 %v65, %v213
  %v215 = vpop.f32.mrb[0].mxu0
  %v216 = vadd.f32 %v69, %v215
  %v217 = vpop.f32.mrb[0].mxu0
  %v218 = vadd.f32 %v65, %v217
  %v219 = vpop.f32.mrb[0].mxu0
  %v220 = vadd.f32 %v69, %v219
  %221 = vmatprep.mubr.bf16.mxu0 0
  %222 = vmatmul.mubr.bf16.gmra.mrb[0].mxu0 %v138
  %v223 = vpop.f32.mrb[0].mxu0
  %v224 = vadd.f32 %v65, %v223
  %v225 = vpop.f32.mrb[0].mxu0
  %v226 = vadd.f32 %v69, %v225
  %v227 = vpop.f32.mrb[0].mxu0
  %v228 = vadd.f32 %v65, %v227
  %v229 = vpop.f32.mrb[0].mxu0
  %v230 = vadd.f32 %v69, %v229
  %231 = vmatprep.mubr.bf16.mxu0 0
  %232 = vmatmul.mubr.bf16.gmra.mrb[0].mxu0 %v141
  %v233 = vpop.f32.mrb[0].mxu0
  %v234 = vadd.f32 %v65, %v233
  %v235 = vpop.f32.mrb[0].mxu0
  %v236 = vadd.f32 %v69, %v235
  %v237 = vpop.f32.mrb[0].mxu0
  %v238 = vadd.f32 %v65, %v237
  %v239 = vpop.f32.mrb[0].mxu0
  %v240 = vadd.f32 %v69, %v239
  %241 = vmatprep.mubr.bf16.mxu0 0
  %242 = vmatmul.mubr.bf16.gmra.mrb[0].mxu0 %v144
  %v243 = vpop.f32.mrb[0].mxu0
  %v244 = vadd.f32 %v65, %v243
  %v245 = vpop.f32.mrb[0].mxu0
  %v246 = vadd.f32 %v69, %v245
  %v247 = vpop.f32.mrb[0].mxu0
  %v248 = vadd.f32 %v65, %v247
  %v249 = vpop.f32.mrb[0].mxu0
  %v250 = vadd.f32 %v69, %v249
  %251 = vmatprep.mubr.bf16.mxu0 0
  %252 = vmatmul.mubr.bf16.gmra.mrb[0].mxu0 %v147
  %v253 = vpop.f32.mrb[0].mxu0
  %v254 = vadd.f32 %v65, %v253
  %v255 = vpop.f32.mrb[0].mxu0
  %v256 = vadd.f32 %v69, %v255
  %v257 = vpop.f32.mrb[0].mxu0
  %v258 = vadd.f32 %v65, %v257
  %v259 = vpop.f32.mrb[0].mxu0
  %v260 = vadd.f32 %v69, %v259
  %261 = vmatprep.mubr.bf16.mxu0 0
  %262 = vmatmul.mubr.bf16.gmra.mrb[0].mxu0 %v150
  %v263 = vpop.f32.mrb[0].mxu0
  %v264 = vadd.f32 %v65, %v263
  %v265 = vpop.f32.mrb[0].mxu0
  %v266 = vadd.f32 %v69, %v265
  %v267 = vpop.f32.mrb[0].mxu0
  %v268 = vadd.f32 %v65, %v267
  %v269 = vpop.f32.mrb[0].mxu0
  %v270 = vadd.f32 %v69, %v269
  %271 = vdwg.mxu0
  %v272 = vmax.f32 %v194, 0.0
  %v273 = vmax.f32 %v196, 0.0
  %v274 = vmax.f32 %v198, 0.0
  %v275 = vmax.f32 %v200, 0.0
  %v276 = vmax.f32 %v204, 0.0
  %v277 = vmax.f32 %v206, 0.0
  %v278 = vmax.f32 %v208, 0.0
  %v279 = vmax.f32 %v210, 0.0
  %v280 = vmax.f32 %v214, 0.0
  %v281 = vmax.f32 %v216, 0.0
  %v282 = vmax.f32 %v218, 0.0
  %v283 = vmax.f32 %v220, 0.0
  %v284 = vmax.f32 %v224, 0.0
  %v285 = vmax.f32 %v226, 0.0
  %v286 = vmax.f32 %v228, 0.0
  %v287 = vmax.f32 %v230, 0.0
  %v288 = vmax.f32 %v234, 0.0
  %v289 = vmax.f32 %v236, 0.0
  %v290 = vmax.f32 %v238, 0.0
  %v291 = vmax.f32 %v240, 0.0
  %v292 = vmax.f32 %v244, 0.0
  %v293 = vmax.f32 %v246, 0.0
  %v294 = vmax.f32 %v248, 0.0
  %v295 = vmax.f32 %v250, 0.0
  %v296 = vmax.f32 %v254, 0.0
  %v297 = vmax.f32 %v256, 0.0
  %v298 = vmax.f32 %v258, 0.0
  %v299 = vmax.f32 %v260, 0.0
  %v300 = vmax.f32 %v264, 0.0
  %v301 = vmax.f32 %v266, 0.0
  %v302 = vmax.f32 %v268, 0.0
  %v303 = vmax.f32 %v270, 0.0
  %v304 = vpack.c.bf16 %v274, %v272
  %v305 = vpack.c.bf16 %v275, %v273
  %v306 = vpack.c.bf16 %v278, %v276
  %v307 = vpack.c.bf16 %v279, %v277
  %v308 = vpack.c.bf16 %v282, %v280
  %v309 = vpack.c.bf16 %v283, %v281
  %v310 = vpack.c.bf16 %v286, %v284
  %v311 = vpack.c.bf16 %v287, %v285
  %v312 = vpack.c.bf16 %v290, %v288
  %v313 = vpack.c.bf16 %v291, %v289
  %v314 = vpack.c.bf16 %v294, %v292
  %v315 = vpack.c.bf16 %v295, %v293
  %v316 = vpack.c.bf16 %v298, %v296
  %v317 = vpack.c.bf16 %v299, %v297
  %v318 = vpack.c.bf16 %v302, %v300
  %v319 = vpack.c.bf16 %v303, %v301
  %v320 = vld [vmem:[%s3] sm:$0xff]
  %v321 = vld [vmem:[%s3 + $0x8] sm:$0xff]
  %v322 = vld [vmem:[%s3 + $0x10] sm:$0xff]
  %v323 = vld [vmem:[%s3 + $0x18] sm:$0xff]
  %v324 = vld [vmem:[%s3 + $0x20] sm:$0xff]
  %v325 = vld [vmem:[%s3 + $0x28] sm:$0xff]
  %v326 = vld [vmem:[%s3 + $0x30] sm:$0xff]
  %v327 = vld [vmem:[%s3 + $0x38] sm:$0xff]
  %v328 = vld [vmem:[%s3 + $0x40] sm:$0xff]
  %v329 = vld [vmem:[%s3 + $0x48] sm:$0xff]
  %v330 = vld [vmem:[%s3 + $0x50] sm:$0xff]
  %v331 = vld [vmem:[%s3 + $0x58] sm:$0xff]
  %v332 = vld [vmem:[%s3 + $0x60] sm:$0xff]
  %v333 = vld [vmem:[%s3 + $0x68] sm:$0xff]
  %v334 = vld [vmem:[%s3 + $0x70] sm:$0xff]
  %v335 = vld [vmem:[%s3 + $0x78] sm:$0xff]
  %v336 = vld [vmem:[%s3 + $0x80] sm:$0xff]
  %v337 = vld [vmem:[%s3 + $0x88] sm:$0xff]
  %v338 = vld [vmem:[%s3 + $0x90] sm:$0xff]
  %v339 = vld [vmem:[%s3 + $0x98] sm:$0xff]
  %v340 = vld [vmem:[%s3 + $0xa0] sm:$0xff]
  %v341 = vld [vmem:[%s3 + $0xa8] sm:$0xff]
  %v342 = vld [vmem:[%s3 + $0xb0] sm:$0xff]
  %v343 = vld [vmem:[%s3 + $0xb8] sm:$0xff]
  %v344 = vld [vmem:[%s3 + $0xc0] sm:$0xff]
  %v345 = vld [vmem:[%s3 + $0xc8] sm:$0xff]
  %v346 = vld [vmem:[%s3 + $0xd0] sm:$0xff]
  %v347 = vld [vmem:[%s3 + $0xd8] sm:$0xff]
  %v348 = vld [vmem:[%s3 + $0xe0] sm:$0xff]
  %v349 = vld [vmem:[%s3 + $0xe8] sm:$0xff]
  %v350 = vld [vmem:[%s3 + $0xf0] sm:$0xff]
  %v351 = vld [vmem:[%s3 + $0xf8] sm:$0xff]
  %v384 = vunpack.c.l.b16 %v320
  %v385 = vunpack.c.h.b16 %v320
  %v386 = vunpack.c.l.b16 %v321
  %v387 = vunpack.c.h.b16 %v321
  %v388 = vunpack.c.l.b16 %v322
  %v389 = vunpack.c.h.b16 %v322
  %v390 = vunpack.c.l.b16 %v323
  %v391 = vunpack.c.h.b16 %v323
  %v392 = vunpack.c.l.b16 %v324
  %v393 = vunpack.c.h.b16 %v324
  %v394 = vunpack.c.l.b16 %v325
  %v395 = vunpack.c.h.b16 %v325
  %v396 = vunpack.c.l.b16 %v326
  %v397 = vunpack.c.h.b16 %v326
  %v398 = vunpack.c.l.b16 %v327
  %v399 = vunpack.c.h.b16 %v327
  %v400 = vunpack.c.l.b16 %v328
  %v401 = vunpack.c.h.b16 %v328
  %v402 = vunpack.c.l.b16 %v329
  %v403 = vunpack.c.h.b16 %v329
  %v404 = vunpack.c.l.b16 %v330
  %v405 = vunpack.c.h.b16 %v330
  %v406 = vunpack.c.l.b16 %v331
  %v407 = vunpack.c.h.b16 %v331
  %v408 = vunpack.c.l.b16 %v332
  %v409 = vunpack.c.h.b16 %v332
  %v410 = vunpack.c.l.b16 %v333
  %v411 = vunpack.c.h.b16 %v333
  %v412 = vunpack.c.l.b16 %v334
  %v413 = vunpack.c.h.b16 %v334
  %v414 = vunpack.c.l.b16 %v335
  %v415 = vunpack.c.h.b16 %v335
  %v416 = vunpack.c.l.b16 %v336
  %v417 = vunpack.c.h.b16 %v336
  %v418 = vunpack.c.l.b16 %v337
  %v419 = vunpack.c.h.b16 %v337
  %v420 = vunpack.c.l.b16 %v338
  %v421 = vunpack.c.h.b16 %v338
  %v422 = vunpack.c.l.b16 %v339
  %v423 = vunpack.c.h.b16 %v339
  %v424 = vunpack.c.l.b16 %v340
  %v425 = vunpack.c.h.b16 %v340
  %v426 = vunpack.c.l.b16 %v341
  %v427 = vunpack.c.h.b16 %v341
  %v428 = vunpack.c.l.b16 %v342
  %v429 = vunpack.c.h.b16 %v342
  %v430 = vunpack.c.l.b16 %v343
  %v431 = vunpack.c.h.b16 %v343
  %v432 = vunpack.c.l.b16 %v344
  %v433 = vunpack.c.h.b16 %v344
  %v434 = vunpack.c.l.b16 %v345
  %v435 = vunpack.c.h.b16 %v345
  %v436 = vunpack.c.l.b16 %v346
  %v437 = vunpack.c.h.b16 %v346
  %v438 = vunpack.c.l.b16 %v347
  %v439 = vunpack.c.h.b16 %v347
  %v440 = vunpack.c.l.b16 %v348
  %v441 = vunpack.c.h.b16 %v348
  %v442 = vunpack.c.l.b16 %v349
  %v443 = vunpack.c.h.b16 %v349
  %v444 = vunpack.c.l.b16 %v350
  %v445 = vunpack.c.h.b16 %v350
  %v446 = vunpack.c.l.b16 %v351
  %v447 = vunpack.c.h.b16 %v351
  %v448 = vpack.c.b16 %v386, %v384
  %v449 = vpack.c.b16 %v387, %v385
  %v450 = vpack.c.b16 %v390, %v388
  %v451 = vpack.c.b16 %v391, %v389
  %v452 = vpack.c.b16 %v394, %v392
  %v453 = vpack.c.b16 %v395, %v393
  %v454 = vpack.c.b16 %v398, %v396
  %v455 = vpack.c.b16 %v399, %v397
  %v456 = vpack.c.b16 %v402, %v400
  %v457 = vpack.c.b16 %v403, %v401
  %v458 = vpack.c.b16 %v406, %v404
  %v459 = vpack.c.b16 %v407, %v405
  %v460 = vpack.c.b16 %v410, %v408
  %v461 = vpack.c.b16 %v411, %v409
  %v462 = vpack.c.b16 %v414, %v412
  %v463 = vpack.c.b16 %v415, %v413
  %v464 = vpack.c.b16 %v418, %v416
  %v465 = vpack.c.b16 %v419, %v417
  %v466 = vpack.c.b16 %v422, %v420
  %v467 = vpack.c.b16 %v423, %v421
  %v468 = vpack.c.b16 %v426, %v424
  %v469 = vpack.c.b16 %v427, %v425
  %v470 = vpack.c.b16 %v430, %v428
  %v471 = vpack.c.b16 %v431, %v429
  %v472 = vpack.c.b16 %v434, %v432
  %v473 = vpack.c.b16 %v435, %v433
  %v474 = vpack.c.b16 %v438, %v436
  %v475 = vpack.c.b16 %v439, %v437
  %v476 = vpack.c.b16 %v442, %v440
  %v477 = vpack.c.b16 %v443, %v441
  %v478 = vpack.c.b16 %v446, %v444
  %v479 = vpack.c.b16 %v447, %v445
  %512 = vmatprep.subr.bf16.mxu0 %v449
  %513 = vmatpush1.bf16.msra.mxu0 %v448
  %514 = vmatprep.subr.bf16.mxu0 %v451
  %515 = vmatpush1.bf16.msra.mxu0 %v450
  %516 = vmatprep.subr.bf16.mxu0 %v453
  %517 = vmatpush1.bf16.msra.mxu0 %v452
  %518 = vmatprep.subr.bf16.mxu0 %v455
  %519 = vmatpush1.bf16.msra.mxu0 %v454
  %520 = vmatprep.subr.bf16.mxu0 %v457
  %521 = vmatpush1.bf16.msra.mxu0 %v456
  %522 = vmatprep.subr.bf16.mxu0 %v459
  %523 = vmatpush1.bf16.msra.mxu0 %v458
  %524 = vmatprep.subr.bf16.mxu0 %v461
  %525 = vmatpush1.bf16.msra.mxu0 %v460
  %526 = vmatprep.subr.bf16.mxu0 %v463
  %527 = vmatpush1.bf16.msra.mxu0 %v462
  %528 = vmatprep.subr.bf16.mxu0 %v465
  %529 = vmatpush1.bf16.msra.mxu0 %v464
  %530 = vmatprep.subr.bf16.mxu0 %v467
  %531 = vmatpush1.bf16.msra.mxu0 %v466
  %532 = vmatprep.subr.bf16.mxu0 %v469
  %533 = vmatpush1.bf16.msra.mxu0 %v468
  %534 = vmatprep.subr.bf16.mxu0 %v471
  %535 = vmatpush1.bf16.msra.mxu0 %v470
  %536 = vmatprep.subr.bf16.mxu0 %v473
  %537 = vmatpush1.bf16.msra.mxu0 %v472
  %538 = vmatprep.subr.bf16.mxu0 %v475
  %539 = vmatpush1.bf16.msra.mxu0 %v474
  %540 = vmatprep.subr.bf16.mxu0 %v477
  %541 = vmatpush1.bf16.msra.mxu0 %v476
  %542 = vmatprep.subr.bf16.mxu0 %v479
  %543 = vmatpush1.bf16.msra.mxu0 %v478
  %544 = vmatprep.mubr.bf16.mxu0 %v305
  %545 = vmatmul.mubr.bf16.gmra.mrb[0].mxu0 %v304
  %v546 = vpop.f32.mrb[0].mxu0
  %v547 = vadd.f32 0.0, %v546
  %v548 = vpop.f32.mrb[0].mxu0
  %v549 = vadd.f32 0.0, %v548
  %v550 = vpop.f32.mrb[0].mxu0
  %v551 = vadd.f32 0.0, %v550
  %v552 = vpop.f32.mrb[0].mxu0
  %v553 = vadd.f32 0.0, %v552
  %554 = vmatprep.mubr.bf16.mxu0 %v307
  %555 = vmatmul.mubr.bf16.gmra.mrb[0].mxu0 %v306
  %v556 = vpop.f32.mrb[0].mxu0
  %v557 = vadd.f32 0.0, %v556
  %v558 = vpop.f32.mrb[0].mxu0
  %v559 = vadd.f32 0.0, %v558
  %v560 = vpop.f32.mrb[0].mxu0
  %v561 = vadd.f32 0.0, %v560
  %v562 = vpop.f32.mrb[0].mxu0
  %v563 = vadd.f32 0.0, %v562
  %564 = vmatprep.mubr.bf16.mxu0 %v309
  %565 = vmatmul.mubr.bf16.gmra.mrb[0].mxu0 %v308
  %v566 = vpop.f32.mrb[0].mxu0
  %v567 = vadd.f32 0.0, %v566
  %v568 = vpop.f32.mrb[0].mxu0
  %v569 = vadd.f32 0.0, %v568
  %v570 = vpop.f32.mrb[0].mxu0
  %v571 = vadd.f32 0.0, %v570
  %v572 = vpop.f32.mrb[0].mxu0
  %v573 = vadd.f32 0.0, %v572
  %574 = vmatprep.mubr.bf16.mxu0 %v311
  %575 = vmatmul.mubr.bf16.gmra.mrb[0].mxu0 %v310
  %v576 = vpop.f32.mrb[0].mxu0
  %v577 = vadd.f32 0.0, %v576
  %v578 = vpop.f32.mrb[0].mxu0
  %v579 = vadd.f32 0.0, %v578
  %v580 = vpop.f32.mrb[0].mxu0
  %v581 = vadd.f32 0.0, %v580
  %v582 = vpop.f32.mrb[0].mxu0
  %v583 = vadd.f32 0.0, %v582
  %584 = vmatprep.mubr.bf16.mxu0 %v313
  %585 = vmatmul.mubr.bf16.gmra.mrb[0].mxu0 %v312
  %v586 = vpop.f32.mrb[0].mxu0
  %v587 = vadd.f32 0.0, %v586
  %v588 = vpop.f32.mrb[0].mxu0
  %v589 = vadd.f32 0.0, %v588
  %v590 = vpop.f32.mrb[0].mxu0
  %v591 = vadd.f32 0.0, %v590
  %v592 = vpop.f32.mrb[0].mxu0
  %v593 = vadd.f32 0.0, %v592
  %594 = vmatprep.mubr.bf16.mxu0 %v315
  %595 = vmatmul.mubr.bf16.gmra.mrb[0].mxu0 %v314
  %v596 = vpop.f32.mrb[0].mxu0
  %v597 = vadd.f32 0.0, %v596
  %v598 = vpop.f32.mrb[0].mxu0
  %v599 = vadd.f32 0.0, %v598
  %v600 = vpop.f32.mrb[0].mxu0
  %v601 = vadd.f32 0.0, %v600
  %v602 = vpop.f32.mrb[0].mxu0
  %v603 = vadd.f32 0.0, %v602
  %604 = vmatprep.mubr.bf16.mxu0 %v317
  %605 = vmatmul.mubr.bf16.gmra.mrb[0].mxu0 %v316
  %v606 = vpop.f32.mrb[0].mxu0
  %v607 = vadd.f32 0.0, %v606
  %v608 = vpop.f32.mrb[0].mxu0
  %v609 = vadd.f32 0.0, %v608
  %v610 = vpop.f32.mrb[0].mxu0
  %v611 = vadd.f32 0.0, %v610
  %v612 = vpop.f32.mrb[0].mxu0
  %v613 = vadd.f32 0.0, %v612
  %614 = vmatprep.mubr.bf16.mxu0 %v319
  %615 = vmatmul.mubr.bf16.gmra.mrb[0].mxu0 %v318
  %v616 = vpop.f32.mrb[0].mxu0
  %v617 = vadd.f32 0.0, %v616
  %v618 = vpop.f32.mrb[0].mxu0
  %v619 = vadd.f32 0.0, %v618
  %v620 = vpop.f32.mrb[0].mxu0
  %v621 = vadd.f32 0.0, %v620
  %v622 = vpop.f32.mrb[0].mxu0
  %v623 = vadd.f32 0.0, %v622
  %624 = vdwg.mxu0
  %641 = vrot.lane.b32.xlu0 %v547, 64
  %v642 = vpop.permute.xlu0 %641
  %643 = vrot.lane.b32.xlu0 %v551, 64
  %v644 = vpop.permute.xlu0 %643
  %645 = vrot.lane.b32.xlu0 %v557, 64
  %v646 = vpop.permute.xlu0 %645
  %647 = vrot.lane.b32.xlu0 %v561, 64
  %v648 = vpop.permute.xlu0 %647
  %649 = vrot.lane.b32.xlu0 %v567, 64
  %v650 = vpop.permute.xlu0 %649
  %651 = vrot.lane.b32.xlu0 %v571, 64
  %v652 = vpop.permute.xlu0 %651
  %653 = vrot.lane.b32.xlu0 %v577, 64
  %v654 = vpop.permute.xlu0 %653
  %655 = vrot.lane.b32.xlu0 %v581, 64
  %v656 = vpop.permute.xlu0 %655
  %657 = vrot.lane.b32.xlu0 %v587, 64
  %v658 = vpop.permute.xlu0 %657
  %659 = vrot.lane.b32.xlu0 %v591, 64
  %v660 = vpop.permute.xlu0 %659
  %661 = vrot.lane.b32.xlu0 %v597, 64
  %v662 = vpop.permute.xlu0 %661
  %663 = vrot.lane.b32.xlu0 %v601, 64
  %v664 = vpop.permute.xlu0 %663
  %665 = vrot.lane.b32.xlu0 %v607, 64
  %v666 = vpop.permute.xlu0 %665
  %667 = vrot.lane.b32.xlu0 %v611, 64
  %v668 = vpop.permute.xlu0 %667
  %669 = vrot.lane.b32.xlu0 %v617, 64
  %v670 = vpop.permute.xlu0 %669
  %671 = vrot.lane.b32.xlu0 %v621, 64
  %v672 = vpop.permute.xlu0 %671
  %v689 = vrot.slane %v642, 1
  %v690 = vrot.slane %v644, 1
  %v691 = vrot.slane %v646, 1
  %v692 = vrot.slane %v648, 1
  %v693 = vrot.slane %v650, 1
  %v694 = vrot.slane %v652, 1
  %v695 = vrot.slane %v654, 1
  %v696 = vrot.slane %v656, 1
  %v697 = vrot.slane %v658, 1
  %v698 = vrot.slane %v660, 1
  %v699 = vrot.slane %v662, 1
  %v700 = vrot.slane %v664, 1
  %v701 = vrot.slane %v666, 1
  %v702 = vrot.slane %v668, 1
  %v703 = vrot.slane %v670, 1
  %v704 = vrot.slane %v672, 1
  %v705 = vlaneseq
  %v706 = vshrl.u32 %v705, 7
  %vm707 = vcmp.lt.s32.totalorder %v706, 7
  %v708 = vsel %vm707, %v703, %v704
  %v709 = vsel %vm707, %v702, %v703
  %v710 = vsel %vm707, %v701, %v702
  %v711 = vsel %vm707, %v700, %v701
  %v712 = vsel %vm707, %v699, %v700
  %v713 = vsel %vm707, %v698, %v699
  %v714 = vsel %vm707, %v697, %v698
  %v715 = vsel %vm707, %v696, %v697
  %v716 = vsel %vm707, %v695, %v696
  %v717 = vsel %vm707, %v694, %v695
  %v718 = vsel %vm707, %v693, %v694
  %v719 = vsel %vm707, %v692, %v693
  %v720 = vsel %vm707, %v691, %v692
  %v721 = vsel %vm707, %v690, %v691
  %v722 = vsel %vm707, %v689, %v690
  %v723 = vsel %vm707, %v704, %v689
  %v724 = vadd.f32 %v547, %v722
  %v725 = vadd.f32 %v551, %v721
  %v726 = vadd.f32 %v557, %v720
  %v727 = vadd.f32 %v561, %v719
  %v728 = vadd.f32 %v567, %v718
  %v729 = vadd.f32 %v571, %v717
  %v730 = vadd.f32 %v577, %v716
  %v731 = vadd.f32 %v581, %v715
  %v732 = vadd.f32 %v587, %v714
  %v733 = vadd.f32 %v591, %v713
  %v734 = vadd.f32 %v597, %v712
  %v735 = vadd.f32 %v601, %v711
  %v736 = vadd.f32 %v607, %v710
  %v737 = vadd.f32 %v611, %v709
  %v738 = vadd.f32 %v617, %v708
  %v739 = vadd.f32 %v621, %v723
  %v740 = vrot.slane %v549, 2
  %v741 = vrot.slane %v553, 2
  %v742 = vrot.slane %v559, 2
  %v743 = vrot.slane %v563, 2
  %v744 = vrot.slane %v569, 2
  %v745 = vrot.slane %v573, 2
  %v746 = vrot.slane %v579, 2
  %v747 = vrot.slane %v583, 2
  %v748 = vrot.slane %v589, 2
  %v749 = vrot.slane %v593, 2
  %v750 = vrot.slane %v599, 2
  %v751 = vrot.slane %v603, 2
  %v752 = vrot.slane %v609, 2
  %v753 = vrot.slane %v613, 2
  %v754 = vrot.slane %v619, 2
  %v755 = vrot.slane %v623, 2
  %vm756 = vcmp.lt.s32.totalorder %v706, 6
  %v757 = vsel %vm756, %v754, %v755
  %v758 = vsel %vm756, %v753, %v754
  %v759 = vsel %vm756, %v752, %v753
  %v760 = vsel %vm756, %v751, %v752
  %v761 = vsel %vm756, %v750, %v751
  %v762 = vsel %vm756, %v749, %v750
  %v763 = vsel %vm756, %v748, %v749
  %v764 = vsel %vm756, %v747, %v748
  %v765 = vsel %vm756, %v746, %v747
  %v766 = vsel %vm756, %v745, %v746
  %v767 = vsel %vm756, %v744, %v745
  %v768 = vsel %vm756, %v743, %v744
  %v769 = vsel %vm756, %v742, %v743
  %v770 = vsel %vm756, %v741, %v742
  %v771 = vsel %vm756, %v740, %v741
  %v772 = vsel %vm756, %v755, %v740
  %v773 = vadd.f32 %v724, %v771
  %v774 = vadd.f32 %v725, %v770
  %v775 = vadd.f32 %v726, %v769
  %v776 = vadd.f32 %v727, %v768
  %v777 = vadd.f32 %v728, %v767
  %v778 = vadd.f32 %v729, %v766
  %v779 = vadd.f32 %v730, %v765
  %v780 = vadd.f32 %v731, %v764
  %v781 = vadd.f32 %v732, %v763
  %v782 = vadd.f32 %v733, %v762
  %v783 = vadd.f32 %v734, %v761
  %v784 = vadd.f32 %v735, %v760
  %v785 = vadd.f32 %v736, %v759
  %v786 = vadd.f32 %v737, %v758
  %v787 = vadd.f32 %v738, %v757
  %v788 = vadd.f32 %v739, %v772
  %v789 = vld [vmem:[%s4] sm:$0x1]
  %v791 = vlaneseq
  %v792 = vshrl.u32 %v791, 7
  %v793 = vsub.s32 0, %v792
  %v794 = vrot.slane %v789, %v793
  %v796 = vadd.f32 %v773, %v794
  %v797 = vadd.f32 %v774, %v794
  %v798 = vadd.f32 %v775, %v794
  %v799 = vadd.f32 %v776, %v794
  %v800 = vadd.f32 %v777, %v794
  %v801 = vadd.f32 %v778, %v794
  %v802 = vadd.f32 %v779, %v794
  %v803 = vadd.f32 %v780, %v794
  %v804 = vadd.f32 %v781, %v794
  %v805 = vadd.f32 %v782, %v794
  %v806 = vadd.f32 %v783, %v794
  %v807 = vadd.f32 %v784, %v794
  %v808 = vadd.f32 %v785, %v794
  %v809 = vadd.f32 %v786, %v794
  %v810 = vadd.f32 %v787, %v794
  %v811 = vadd.f32 %v788, %v794
  %v812 = vmax.f32 %v796, 0.0
  %v813 = vmax.f32 %v797, 0.0
  %v814 = vmax.f32 %v798, 0.0
  %v815 = vmax.f32 %v799, 0.0
  %v816 = vmax.f32 %v800, 0.0
  %v817 = vmax.f32 %v801, 0.0
  %v818 = vmax.f32 %v802, 0.0
  %v819 = vmax.f32 %v803, 0.0
  %v820 = vmax.f32 %v804, 0.0
  %v821 = vmax.f32 %v805, 0.0
  %v822 = vmax.f32 %v806, 0.0
  %v823 = vmax.f32 %v807, 0.0
  %v824 = vmax.f32 %v808, 0.0
  %v825 = vmax.f32 %v809, 0.0
  %v826 = vmax.f32 %v810, 0.0
  %v827 = vmax.f32 %v811, 0.0
  %v828 = vpack.c.bf16 %v813, %v812
  %v829 = vpack.c.bf16 %v815, %v814
  %v830 = vpack.c.bf16 %v817, %v816
  %v831 = vpack.c.bf16 %v819, %v818
  %v832 = vpack.c.bf16 %v821, %v820
  %v833 = vpack.c.bf16 %v823, %v822
  %v834 = vpack.c.bf16 %v825, %v824
  %v835 = vpack.c.bf16 %v827, %v826
  %v836 = vld [vmem:[%s5] sm:$0xf]
  %v837 = vld [vmem:[%s5 + $0x4] sm:$0xf]
  %v838 = vld [vmem:[%s5 + $0x8] sm:$0xf]
  %v839 = vld [vmem:[%s5 + $0xc] sm:$0xf]
  %v840 = vld [vmem:[%s5 + $0x10] sm:$0xf]
  %v841 = vld [vmem:[%s5 + $0x14] sm:$0xf]
  %v842 = vld [vmem:[%s5 + $0x18] sm:$0xf]
  %v843 = vld [vmem:[%s5 + $0x1c] sm:$0xf]
  %v852 = vunpack.c.l.b16 %v836
  %v853 = vunpack.c.l.b16 %v837
  %v854 = vunpack.c.l.b16 %v838
  %v855 = vunpack.c.l.b16 %v839
  %v856 = vunpack.c.l.b16 %v840
  %v857 = vunpack.c.l.b16 %v841
  %v858 = vunpack.c.l.b16 %v842
  %v859 = vunpack.c.l.b16 %v843
  %v860 = vpack.c.b16 %v853, %v852
  %v861 = vpack.c.b16 %v855, %v854
  %v862 = vpack.c.b16 %v857, %v856
  %v863 = vpack.c.b16 %v859, %v858
  %vm868 = vcmask 523264
  %v870 = vsel %vm868, %v828, 0
  %v873 = vsel %vm868, %v829, 0
  %v876 = vsel %vm868, %v830, 0
  %v879 = vsel %vm868, %v831, 0
  %v882 = vsel %vm868, %v832, 0
  %v885 = vsel %vm868, %v833, 0
  %v888 = vsel %vm868, %v834, 0
  %v891 = vsel %vm868, %v835, 0
  %893 = vmatprep.subr.bf16.mxu0 0
  %894 = vmatpush1.bf16.msra.mxu0 %v860
  %895 = vmatprep.subr.bf16.mxu0 0
  %896 = vmatpush1.bf16.msra.mxu0 %v861
  %897 = vmatprep.subr.bf16.mxu0 0
  %898 = vmatpush1.bf16.msra.mxu0 %v862
  %899 = vmatprep.subr.bf16.mxu0 0
  %900 = vmatpush1.bf16.msra.mxu0 %v863
  %901 = vmatprep.subr.bf16.mxu0 0
  %902 = vmatpush1.bf16.msra.mxu0 0
  %903 = vmatprep.subr.bf16.mxu0 0
  %904 = vmatpush1.bf16.msra.mxu0 0
  %905 = vmatprep.subr.bf16.mxu0 0
  %906 = vmatpush1.bf16.msra.mxu0 0
  %907 = vmatprep.subr.bf16.mxu0 0
  %908 = vmatpush1.bf16.msra.mxu0 0
  %909 = vmatprep.subr.bf16.mxu0 0
  %910 = vmatpush1.bf16.msra.mxu0 0
  %911 = vmatprep.subr.bf16.mxu0 0
  %912 = vmatpush1.bf16.msra.mxu0 0
  %913 = vmatprep.subr.bf16.mxu0 0
  %914 = vmatpush1.bf16.msra.mxu0 0
  %915 = vmatprep.subr.bf16.mxu0 0
  %916 = vmatpush1.bf16.msra.mxu0 0
  %917 = vmatprep.subr.bf16.mxu0 0
  %918 = vmatpush1.bf16.msra.mxu0 0
  %919 = vmatprep.subr.bf16.mxu0 0
  %920 = vmatpush1.bf16.msra.mxu0 0
  %921 = vmatprep.subr.bf16.mxu0 0
  %922 = vmatpush1.bf16.msra.mxu0 0
  %923 = vmatprep.subr.bf16.mxu0 0
  %924 = vmatpush1.bf16.msra.mxu0 0
  %925 = vmatprep.mubr.bf16.mxu0 0
  %926 = vmatmul.mubr.bf16.gmra.mrb[0].mxu0 %v870
  %v927 = vpop.f32.mrb[0].mxu0
  %v928 = vadd.f32 0.0, %v927
  %v929 = vpop.f32.mrb[0].mxu0
  %v930 = vpop.f32.mrb[0].mxu0
  %v931 = vadd.f32 0.0, %v930
  %v932 = vpop.f32.mrb[0].mxu0
  %933 = vmatprep.mubr.bf16.mxu0 0
  %934 = vmatmul.mubr.bf16.gmra.mrb[0].mxu0 %v873
  %v935 = vpop.f32.mrb[0].mxu0
  %v936 = vadd.f32 0.0, %v935
  %v937 = vpop.f32.mrb[0].mxu0
  %v938 = vpop.f32.mrb[0].mxu0
  %v939 = vadd.f32 0.0, %v938
  %v940 = vpop.f32.mrb[0].mxu0
  %941 = vmatprep.mubr.bf16.mxu0 0
  %942 = vmatmul.mubr.bf16.gmra.mrb[0].mxu0 %v876
  %v943 = vpop.f32.mrb[0].mxu0
  %v944 = vadd.f32 0.0, %v943
  %v945 = vpop.f32.mrb[0].mxu0
  %v946 = vpop.f32.mrb[0].mxu0
  %v947 = vadd.f32 0.0, %v946
  %v948 = vpop.f32.mrb[0].mxu0
  %949 = vmatprep.mubr.bf16.mxu0 0
  %950 = vmatmul.mubr.bf16.gmra.mrb[0].mxu0 %v879
  %v951 = vpop.f32.mrb[0].mxu0
  %v952 = vadd.f32 0.0, %v951
  %v953 = vpop.f32.mrb[0].mxu0
  %v954 = vpop.f32.mrb[0].mxu0
  %v955 = vadd.f32 0.0, %v954
  %v956 = vpop.f32.mrb[0].mxu0
  %957 = vmatprep.mubr.bf16.mxu0 0
  %958 = vmatmul.mubr.bf16.gmra.mrb[0].mxu0 %v882
  %v959 = vpop.f32.mrb[0].mxu0
  %v960 = vadd.f32 0.0, %v959
  %v961 = vpop.f32.mrb[0].mxu0
  %v962 = vpop.f32.mrb[0].mxu0
  %v963 = vadd.f32 0.0, %v962
  %v964 = vpop.f32.mrb[0].mxu0
  %965 = vmatprep.mubr.bf16.mxu0 0
  %966 = vmatmul.mubr.bf16.gmra.mrb[0].mxu0 %v885
  %v967 = vpop.f32.mrb[0].mxu0
  %v968 = vadd.f32 0.0, %v967
  %v969 = vpop.f32.mrb[0].mxu0
  %v970 = vpop.f32.mrb[0].mxu0
  %v971 = vadd.f32 0.0, %v970
  %v972 = vpop.f32.mrb[0].mxu0
  %973 = vmatprep.mubr.bf16.mxu0 0
  %974 = vmatmul.mubr.bf16.gmra.mrb[0].mxu0 %v888
  %v975 = vpop.f32.mrb[0].mxu0
  %v976 = vadd.f32 0.0, %v975
  %v977 = vpop.f32.mrb[0].mxu0
  %v978 = vpop.f32.mrb[0].mxu0
  %v979 = vadd.f32 0.0, %v978
  %v980 = vpop.f32.mrb[0].mxu0
  %981 = vmatprep.mubr.bf16.mxu0 0
  %982 = vmatmul.mubr.bf16.gmra.mrb[0].mxu0 %v891
  %v983 = vpop.f32.mrb[0].mxu0
  %v984 = vadd.f32 0.0, %v983
  %v985 = vpop.f32.mrb[0].mxu0
  %v986 = vpop.f32.mrb[0].mxu0
  %v987 = vadd.f32 0.0, %v986
  %v988 = vpop.f32.mrb[0].mxu0
  %989 = vdwg.mxu0
  %1006 = vrot.lane.b32.xlu0 %v928, 112
  %v1007 = vpop.permute.xlu0 %1006
  %1008 = vrot.lane.b32.xlu0 %v931, 112
  %v1009 = vpop.permute.xlu0 %1008
  %1010 = vrot.lane.b32.xlu0 %v936, 112
  %v1011 = vpop.permute.xlu0 %1010
  %1012 = vrot.lane.b32.xlu0 %v939, 112
  %v1013 = vpop.permute.xlu0 %1012
  %1014 = vrot.lane.b32.xlu0 %v944, 112
  %v1015 = vpop.permute.xlu0 %1014
  %1016 = vrot.lane.b32.xlu0 %v947, 112
  %v1017 = vpop.permute.xlu0 %1016
  %1018 = vrot.lane.b32.xlu0 %v952, 112
  %v1019 = vpop.permute.xlu0 %1018
  %1020 = vrot.lane.b32.xlu0 %v955, 112
  %v1021 = vpop.permute.xlu0 %1020
  %1022 = vrot.lane.b32.xlu0 %v960, 112
  %v1023 = vpop.permute.xlu0 %1022
  %1024 = vrot.lane.b32.xlu0 %v963, 112
  %v1025 = vpop.permute.xlu0 %1024
  %1026 = vrot.lane.b32.xlu0 %v968, 112
  %v1027 = vpop.permute.xlu0 %1026
  %1028 = vrot.lane.b32.xlu0 %v971, 112
  %v1029 = vpop.permute.xlu0 %1028
  %1030 = vrot.lane.b32.xlu0 %v976, 112
  %v1031 = vpop.permute.xlu0 %1030
  %1032 = vrot.lane.b32.xlu0 %v979, 112
  %v1033 = vpop.permute.xlu0 %1032
  %1034 = vrot.lane.b32.xlu0 %v984, 112
  %v1035 = vpop.permute.xlu0 %1034
  %1036 = vrot.lane.b32.xlu0 %v987, 112
  %v1037 = vpop.permute.xlu0 %1036
  %v1054 = vrot.slane %v1007, 1
  %v1055 = vrot.slane %v1009, 1
  %v1056 = vrot.slane %v1011, 1
  %v1057 = vrot.slane %v1013, 1
  %v1058 = vrot.slane %v1015, 1
  %v1059 = vrot.slane %v1017, 1
  %v1060 = vrot.slane %v1019, 1
  %v1061 = vrot.slane %v1021, 1
  %v1062 = vrot.slane %v1023, 1
  %v1063 = vrot.slane %v1025, 1
  %v1064 = vrot.slane %v1027, 1
  %v1065 = vrot.slane %v1029, 1
  %v1066 = vrot.slane %v1031, 1
  %v1067 = vrot.slane %v1033, 1
  %v1068 = vrot.slane %v1035, 1
  %v1069 = vrot.slane %v1037, 1
  %v1070 = vsel %vm707, %v1068, %v1069
  %v1071 = vsel %vm707, %v1067, %v1068
  %v1072 = vsel %vm707, %v1066, %v1067
  %v1073 = vsel %vm707, %v1065, %v1066
  %v1074 = vsel %vm707, %v1064, %v1065
  %v1075 = vsel %vm707, %v1063, %v1064
  %v1076 = vsel %vm707, %v1062, %v1063
  %v1077 = vsel %vm707, %v1061, %v1062
  %v1078 = vsel %vm707, %v1060, %v1061
  %v1079 = vsel %vm707, %v1059, %v1060
  %v1080 = vsel %vm707, %v1058, %v1059
  %v1081 = vsel %vm707, %v1057, %v1058
  %v1082 = vsel %vm707, %v1056, %v1057
  %v1083 = vsel %vm707, %v1055, %v1056
  %v1084 = vsel %vm707, %v1054, %v1055
  %v1085 = vsel %vm707, %v1069, %v1054
  %v1086 = vadd.f32 %v928, %v1084
  %v1087 = vadd.f32 %v931, %v1083
  %v1088 = vadd.f32 %v936, %v1082
  %v1089 = vadd.f32 %v939, %v1081
  %v1090 = vadd.f32 %v944, %v1080
  %v1091 = vadd.f32 %v947, %v1079
  %v1092 = vadd.f32 %v952, %v1078
  %v1093 = vadd.f32 %v955, %v1077
  %v1094 = vadd.f32 %v960, %v1076
  %v1095 = vadd.f32 %v963, %v1075
  %v1096 = vadd.f32 %v968, %v1074
  %v1097 = vadd.f32 %v971, %v1073
  %v1098 = vadd.f32 %v976, %v1072
  %v1099 = vadd.f32 %v979, %v1071
  %v1100 = vadd.f32 %v984, %v1070
  %v1101 = vadd.f32 %v987, %v1085
  %1102 = vrot.lane.b32.xlu0 %v928, 96
  %v1103 = vpop.permute.xlu0 %1102
  %1104 = vrot.lane.b32.xlu0 %v931, 96
  %v1105 = vpop.permute.xlu0 %1104
  %1106 = vrot.lane.b32.xlu0 %v936, 96
  %v1107 = vpop.permute.xlu0 %1106
  %1108 = vrot.lane.b32.xlu0 %v939, 96
  %v1109 = vpop.permute.xlu0 %1108
  %1110 = vrot.lane.b32.xlu0 %v944, 96
  %v1111 = vpop.permute.xlu0 %1110
  %1112 = vrot.lane.b32.xlu0 %v947, 96
  %v1113 = vpop.permute.xlu0 %1112
  %1114 = vrot.lane.b32.xlu0 %v952, 96
  %v1115 = vpop.permute.xlu0 %1114
  %1116 = vrot.lane.b32.xlu0 %v955, 96
  %v1117 = vpop.permute.xlu0 %1116
  %1118 = vrot.lane.b32.xlu0 %v960, 96
  %v1119 = vpop.permute.xlu0 %1118
  %1120 = vrot.lane.b32.xlu0 %v963, 96
  %v1121 = vpop.permute.xlu0 %1120
  %1122 = vrot.lane.b32.xlu0 %v968, 96
  %v1123 = vpop.permute.xlu0 %1122
  %1124 = vrot.lane.b32.xlu0 %v971, 96
  %v1125 = vpop.permute.xlu0 %1124
  %1126 = vrot.lane.b32.xlu0 %v976, 96
  %v1127 = vpop.permute.xlu0 %1126
  %1128 = vrot.lane.b32.xlu0 %v979, 96
  %v1129 = vpop.permute.xlu0 %1128
  %1130 = vrot.lane.b32.xlu0 %v984, 96
  %v1131 = vpop.permute.xlu0 %1130
  %1132 = vrot.lane.b32.xlu0 %v987, 96
  %v1133 = vpop.permute.xlu0 %1132
  %v1150 = vrot.slane %v1103, 2
  %v1151 = vrot.slane %v1105, 2
  %v1152 = vrot.slane %v1107, 2
  %v1153 = vrot.slane %v1109, 2
  %v1154 = vrot.slane %v1111, 2
  %v1155 = vrot.slane %v1113, 2
  %v1156 = vrot.slane %v1115, 2
  %v1157 = vrot.slane %v1117, 2
  %v1158 = vrot.slane %v1119, 2
  %v1159 = vrot.slane %v1121, 2
  %v1160 = vrot.slane %v1123, 2
  %v1161 = vrot.slane %v1125, 2
  %v1162 = vrot.slane %v1127, 2
  %v1163 = vrot.slane %v1129, 2
  %v1164 = vrot.slane %v1131, 2
  %v1165 = vrot.slane %v1133, 2
  %v1166 = vsel %vm756, %v1164, %v1165
  %v1167 = vsel %vm756, %v1163, %v1164
  %v1168 = vsel %vm756, %v1162, %v1163
  %v1169 = vsel %vm756, %v1161, %v1162
  %v1170 = vsel %vm756, %v1160, %v1161
  %v1171 = vsel %vm756, %v1159, %v1160
  %v1172 = vsel %vm756, %v1158, %v1159
  %v1173 = vsel %vm756, %v1157, %v1158
  %v1174 = vsel %vm756, %v1156, %v1157
  %v1175 = vsel %vm756, %v1155, %v1156
  %v1176 = vsel %vm756, %v1154, %v1155
  %v1177 = vsel %vm756, %v1153, %v1154
  %v1178 = vsel %vm756, %v1152, %v1153
  %v1179 = vsel %vm756, %v1151, %v1152
  %v1180 = vsel %vm756, %v1150, %v1151
  %v1181 = vsel %vm756, %v1165, %v1150
  %v1182 = vadd.f32 %v1086, %v1180
  %v1183 = vadd.f32 %v1087, %v1179
  %v1184 = vadd.f32 %v1088, %v1178
  %v1185 = vadd.f32 %v1089, %v1177
  %v1186 = vadd.f32 %v1090, %v1176
  %v1187 = vadd.f32 %v1091, %v1175
  %v1188 = vadd.f32 %v1092, %v1174
  %v1189 = vadd.f32 %v1093, %v1173
  %v1190 = vadd.f32 %v1094, %v1172
  %v1191 = vadd.f32 %v1095, %v1171
  %v1192 = vadd.f32 %v1096, %v1170
  %v1193 = vadd.f32 %v1097, %v1169
  %v1194 = vadd.f32 %v1098, %v1168
  %v1195 = vadd.f32 %v1099, %v1167
  %v1196 = vadd.f32 %v1100, %v1166
  %v1197 = vadd.f32 %v1101, %v1181
  %v1198 = vld [vmem:[%s6] sm:$0x1]
  %v1200 = vlaneseq
  %v1201 = vshrl.u32 %v1200, 7
  %v1202 = vsub.s32 0, %v1201
  %v1203 = vrot.slane %v1198, %v1202
  %v1205 = vadd.f32 %v1182, %v1203
  %v1206 = vadd.f32 %v1183, %v1203
  %v1207 = vadd.f32 %v1184, %v1203
  %v1208 = vadd.f32 %v1185, %v1203
  %v1209 = vadd.f32 %v1186, %v1203
  %v1210 = vadd.f32 %v1187, %v1203
  %v1211 = vadd.f32 %v1188, %v1203
  %v1212 = vadd.f32 %v1189, %v1203
  %v1213 = vadd.f32 %v1190, %v1203
  %v1214 = vadd.f32 %v1191, %v1203
  %v1215 = vadd.f32 %v1192, %v1203
  %v1216 = vadd.f32 %v1193, %v1203
  %v1217 = vadd.f32 %v1194, %v1203
  %v1218 = vadd.f32 %v1195, %v1203
  %v1219 = vadd.f32 %v1196, %v1203
  %v1220 = vadd.f32 %v1197, %v1203
  %v1221 = vmax.f32 %v1205, 0.0
  %v1222 = vmax.f32 %v1206, 0.0
  %v1223 = vmax.f32 %v1207, 0.0
  %v1224 = vmax.f32 %v1208, 0.0
  %v1225 = vmax.f32 %v1209, 0.0
  %v1226 = vmax.f32 %v1210, 0.0
  %v1227 = vmax.f32 %v1211, 0.0
  %v1228 = vmax.f32 %v1212, 0.0
  %v1229 = vmax.f32 %v1213, 0.0
  %v1230 = vmax.f32 %v1214, 0.0
  %v1231 = vmax.f32 %v1215, 0.0
  %v1232 = vmax.f32 %v1216, 0.0
  %v1233 = vmax.f32 %v1217, 0.0
  %v1234 = vmax.f32 %v1218, 0.0
  %v1235 = vmax.f32 %v1219, 0.0
  %v1236 = vmax.f32 %v1220, 0.0
  %v1237 = vld [vmem:[%s7] sm:$0x1]
  %v1239 = vlaneseq
  %v1240 = vshrl.u32 %v1239, 7
  %v1241 = vsub.s32 0, %v1240
  %v1242 = vrot.slane %v1237, %v1241
  %v1244 = vmul.f32 %v1221, %v1242
  %v1245 = vmul.f32 %v1222, %v1242
  %v1246 = vmul.f32 %v1223, %v1242
  %v1247 = vmul.f32 %v1224, %v1242
  %v1248 = vmul.f32 %v1225, %v1242
  %v1249 = vmul.f32 %v1226, %v1242
  %v1250 = vmul.f32 %v1227, %v1242
  %v1251 = vmul.f32 %v1228, %v1242
  %v1252 = vmul.f32 %v1229, %v1242
  %v1253 = vmul.f32 %v1230, %v1242
  %v1254 = vmul.f32 %v1231, %v1242
  %v1255 = vmul.f32 %v1232, %v1242
  %v1256 = vmul.f32 %v1233, %v1242
  %v1257 = vmul.f32 %v1234, %v1242
  %v1258 = vmul.f32 %v1235, %v1242
  %v1259 = vmul.f32 %v1236, %v1242
  %vm1260 = vcmask 130048
  %v1261 = vsel %vm1260, %v1244, 0.0
  %1262 = vadd.xlane.f32.xlu0 %v1261
  %v1263 = vpop.xlane.xlu0 %1262
  %v1264 = vsel %vm1260, %v1245, 0.0
  %1265 = vadd.xlane.f32.xlu0 %v1264
  %v1266 = vpop.xlane.xlu0 %1265
  %v1267 = vsel %vm1260, %v1246, 0.0
  %1268 = vadd.xlane.f32.xlu0 %v1267
  %v1269 = vpop.xlane.xlu0 %1268
  %v1270 = vsel %vm1260, %v1247, 0.0
  %1271 = vadd.xlane.f32.xlu0 %v1270
  %v1272 = vpop.xlane.xlu0 %1271
  %v1273 = vsel %vm1260, %v1248, 0.0
  %1274 = vadd.xlane.f32.xlu0 %v1273
  %v1275 = vpop.xlane.xlu0 %1274
  %v1276 = vsel %vm1260, %v1249, 0.0
  %1277 = vadd.xlane.f32.xlu0 %v1276
  %v1278 = vpop.xlane.xlu0 %1277
  %v1279 = vsel %vm1260, %v1250, 0.0
  %1280 = vadd.xlane.f32.xlu0 %v1279
  %v1281 = vpop.xlane.xlu0 %1280
  %v1282 = vsel %vm1260, %v1251, 0.0
  %1283 = vadd.xlane.f32.xlu0 %v1282
  %v1284 = vpop.xlane.xlu0 %1283
  %v1285 = vsel %vm1260, %v1252, 0.0
  %1286 = vadd.xlane.f32.xlu0 %v1285
  %v1287 = vpop.xlane.xlu0 %1286
  %v1288 = vsel %vm1260, %v1253, 0.0
  %1289 = vadd.xlane.f32.xlu0 %v1288
  %v1290 = vpop.xlane.xlu0 %1289
  %v1291 = vsel %vm1260, %v1254, 0.0
  %1292 = vadd.xlane.f32.xlu0 %v1291
  %v1293 = vpop.xlane.xlu0 %1292
  %v1294 = vsel %vm1260, %v1255, 0.0
  %1295 = vadd.xlane.f32.xlu0 %v1294
  %v1296 = vpop.xlane.xlu0 %1295
  %v1297 = vsel %vm1260, %v1256, 0.0
  %1298 = vadd.xlane.f32.xlu0 %v1297
  %v1299 = vpop.xlane.xlu0 %1298
  %v1300 = vsel %vm1260, %v1257, 0.0
  %1301 = vadd.xlane.f32.xlu0 %v1300
  %v1302 = vpop.xlane.xlu0 %1301
  %v1303 = vsel %vm1260, %v1258, 0.0
  %1304 = vadd.xlane.f32.xlu0 %v1303
  %v1305 = vpop.xlane.xlu0 %1304
  %v1306 = vsel %vm1260, %v1259, 0.0
  %1307 = vadd.xlane.f32.xlu0 %v1306
  %v1308 = vpop.xlane.xlu0 %1307
  %v1309 = vld [vmem:[#allocation2] sm:$0x1]
  %v1311 = vlaneseq
  %v1312 = vshrl.u32 %v1311, 7
  %v1313 = vsub.s32 0, %v1312
  %v1314 = vrot.slane %v1309, %v1313
  %v1316 = vadd.f32 %v1263, %v1314
  %v1317 = vadd.f32 %v1266, %v1314
  %v1318 = vadd.f32 %v1269, %v1314
  %v1319 = vadd.f32 %v1272, %v1314
  %v1320 = vadd.f32 %v1275, %v1314
  %v1321 = vadd.f32 %v1278, %v1314
  %v1322 = vadd.f32 %v1281, %v1314
  %v1323 = vadd.f32 %v1284, %v1314
  %v1324 = vadd.f32 %v1287, %v1314
  %v1325 = vadd.f32 %v1290, %v1314
  %v1326 = vadd.f32 %v1293, %v1314
  %v1327 = vadd.f32 %v1296, %v1314
  %v1328 = vadd.f32 %v1299, %v1314
  %v1329 = vadd.f32 %v1302, %v1314
  %v1330 = vadd.f32 %v1305, %v1314
  %v1331 = vadd.f32 %v1308, %v1314
  %v1332 = vmax.f32 %v1316, 0.0
  %v1333 = vmax.f32 %v1317, 0.0
  %v1334 = vmax.f32 %v1318, 0.0
  %v1335 = vmax.f32 %v1319, 0.0
  %v1336 = vmax.f32 %v1320, 0.0
  %v1337 = vmax.f32 %v1321, 0.0
  %v1338 = vmax.f32 %v1322, 0.0
  %v1339 = vmax.f32 %v1323, 0.0
  %v1340 = vmax.f32 %v1324, 0.0
  %v1341 = vmax.f32 %v1325, 0.0
  %v1342 = vmax.f32 %v1326, 0.0
  %v1343 = vmax.f32 %v1327, 0.0
  %v1344 = vmax.f32 %v1328, 0.0
  %v1345 = vmax.f32 %v1329, 0.0
  %v1346 = vmax.f32 %v1330, 0.0
  %v1347 = vmax.f32 %v1331, 0.0
  %v1348 = vld [vmem:[%s9] sm:$0xff]
  %v1349 = vld [vmem:[%s9 + $0x8] sm:$0xff]
  %1351 = vset.pattern.permute.xlu0 0
  %1352 = vperm.xlu0 %1351, %v1332
  %v1353 = vpop.permute.xlu0 %1352
  %1356 = vset.pattern.permute.xlu0 0
  %1357 = vperm.xlu0 %1356, %v1333
  %v1358 = vpop.permute.xlu0 %1357
  %1361 = vset.pattern.permute.xlu0 0
  %1362 = vperm.xlu0 %1361, %v1334
  %v1363 = vpop.permute.xlu0 %1362
  %1366 = vset.pattern.permute.xlu0 0
  %1367 = vperm.xlu0 %1366, %v1335
  %v1368 = vpop.permute.xlu0 %1367
  %1371 = vset.pattern.permute.xlu0 0
  %1372 = vperm.xlu0 %1371, %v1336
  %v1373 = vpop.permute.xlu0 %1372
  %1376 = vset.pattern.permute.xlu0 0
  %1377 = vperm.xlu0 %1376, %v1337
  %v1378 = vpop.permute.xlu0 %1377
  %1381 = vset.pattern.permute.xlu0 0
  %1382 = vperm.xlu0 %1381, %v1338
  %v1383 = vpop.permute.xlu0 %1382
  %1386 = vset.pattern.permute.xlu0 0
  %1387 = vperm.xlu0 %1386, %v1339
  %v1388 = vpop.permute.xlu0 %1387
  %1391 = vset.pattern.permute.xlu0 0
  %1392 = vperm.xlu0 %1391, %v1340
  %v1393 = vpop.permute.xlu0 %1392
  %1396 = vset.pattern.permute.xlu0 0
  %1397 = vperm.xlu0 %1396, %v1341
  %v1398 = vpop.permute.xlu0 %1397
  %1401 = vset.pattern.permute.xlu0 0
  %1402 = vperm.xlu0 %1401, %v1342
  %v1403 = vpop.permute.xlu0 %1402
  %1406 = vset.pattern.permute.xlu0 0
  %1407 = vperm.xlu0 %1406, %v1343
  %v1408 = vpop.permute.xlu0 %1407
  %1411 = vset.pattern.permute.xlu0 0
  %1412 = vperm.xlu0 %1411, %v1344
  %v1413 = vpop.permute.xlu0 %1412
  %1416 = vset.pattern.permute.xlu0 0
  %1417 = vperm.xlu0 %1416, %v1345
  %v1418 = vpop.permute.xlu0 %1417
  %1421 = vset.pattern.permute.xlu0 0
  %1422 = vperm.xlu0 %1421, %v1346
  %v1423 = vpop.permute.xlu0 %1422
  %1426 = vset.pattern.permute.xlu0 0
  %1427 = vperm.xlu0 %1426, %v1347
  %v1428 = vpop.permute.xlu0 %1427
  %v1430 = vmul.f32 %v1353, %v1348
  %v1431 = vmul.f32 %v1358, %v1349
  %v1432 = vmul.f32 %v1363, %v1348
  %v1433 = vmul.f32 %v1368, %v1349
  %v1434 = vmul.f32 %v1373, %v1348
  %v1435 = vmul.f32 %v1378, %v1349
  %v1436 = vmul.f32 %v1383, %v1348
  %v1437 = vmul.f32 %v1388, %v1349
  %v1438 = vmul.f32 %v1393, %v1348
  %v1439 = vmul.f32 %v1398, %v1349
  %v1440 = vmul.f32 %v1403, %v1348
  %v1441 = vmul.f32 %v1408, %v1349
  %v1442 = vmul.f32 %v1413, %v1348
  %v1443 = vmul.f32 %v1418, %v1349
  %v1444 = vmul.f32 %v1423, %v1348
  %v1445 = vmul.f32 %v1428, %v1349
  %vm1446 = vcmask 15360
  %v1447 = vsel %vm1446, %v1430, 0.0
  %v1448 = vsel %vm1446, %v1431, 0.0
  %v1449 = vadd.f32 %v1447, %v1448
  %v1450 = vrot.slane %v1449, 4
  %v1451 = vadd.f32 %v1449, %v1450
  %v1452 = vrot.slane %v1451, 2
  %v1453 = vadd.f32 %v1451, %v1452
  %v1454 = vrot.slane %v1453, 1
  %v1455 = vadd.f32 %v1453, %v1454
  %v1456 = vsel %vm1446, %v1432, 0.0
  %v1457 = vsel %vm1446, %v1433, 0.0
  %v1458 = vadd.f32 %v1456, %v1457
  %v1459 = vrot.slane %v1458, 4
  %v1460 = vadd.f32 %v1458, %v1459
  %v1461 = vrot.slane %v1460, 2
  %v1462 = vadd.f32 %v1460, %v1461
  %v1463 = vrot.slane %v1462, 1
  %v1464 = vadd.f32 %v1462, %v1463
  %v1465 = vsel %vm1446, %v1434, 0.0
  %v1466 = vsel %vm1446, %v1435, 0.0
  %v1467 = vadd.f32 %v1465, %v1466
  %v1468 = vrot.slane %v1467, 4
  %v1469 = vadd.f32 %v1467, %v1468
  %v1470 = vrot.slane %v1469, 2
  %v1471 = vadd.f32 %v1469, %v1470
  %v1472 = vrot.slane %v1471, 1
  %v1473 = vadd.f32 %v1471, %v1472
  %v1474 = vsel %vm1446, %v1436, 0.0
  %v1475 = vsel %vm1446, %v1437, 0.0
  %v1476 = vadd.f32 %v1474, %v1475
  %v1477 = vrot.slane %v1476, 4
  %v1478 = vadd.f32 %v1476, %v1477
  %v1479 = vrot.slane %v1478, 2
  %v1480 = vadd.f32 %v1478, %v1479
  %v1481 = vrot.slane %v1480, 1
  %v1482 = vadd.f32 %v1480, %v1481
  %v1483 = vsel %vm1446, %v1438, 0.0
  %v1484 = vsel %vm1446, %v1439, 0.0
  %v1485 = vadd.f32 %v1483, %v1484
  %v1486 = vrot.slane %v1485, 4
  %v1487 = vadd.f32 %v1485, %v1486
  %v1488 = vrot.slane %v1487, 2
  %v1489 = vadd.f32 %v1487, %v1488
  %v1490 = vrot.slane %v1489, 1
  %v1491 = vadd.f32 %v1489, %v1490
  %v1492 = vsel %vm1446, %v1440, 0.0
  %v1493 = vsel %vm1446, %v1441, 0.0
  %v1494 = vadd.f32 %v1492, %v1493
  %v1495 = vrot.slane %v1494, 4
  %v1496 = vadd.f32 %v1494, %v1495
  %v1497 = vrot.slane %v1496, 2
  %v1498 = vadd.f32 %v1496, %v1497
  %v1499 = vrot.slane %v1498, 1
  %v1500 = vadd.f32 %v1498, %v1499
  %v1501 = vsel %vm1446, %v1442, 0.0
  %v1502 = vsel %vm1446, %v1443, 0.0
  %v1503 = vadd.f32 %v1501, %v1502
  %v1504 = vrot.slane %v1503, 4
  %v1505 = vadd.f32 %v1503, %v1504
  %v1506 = vrot.slane %v1505, 2
  %v1507 = vadd.f32 %v1505, %v1506
  %v1508 = vrot.slane %v1507, 1
  %v1509 = vadd.f32 %v1507, %v1508
  %v1510 = vsel %vm1446, %v1444, 0.0
  %v1511 = vsel %vm1446, %v1445, 0.0
  %v1512 = vadd.f32 %v1510, %v1511
  %v1513 = vrot.slane %v1512, 4
  %v1514 = vadd.f32 %v1512, %v1513
  %v1515 = vrot.slane %v1514, 2
  %v1516 = vadd.f32 %v1514, %v1515
  %v1517 = vrot.slane %v1516, 1
  %v1518 = vadd.f32 %v1516, %v1517
  %v1519 = vld [vmem:[%s10] sm:$0x1]
  %v1521 = vlaneseq
  %v1522 = vshrl.u32 %v1521, 7
  %v1523 = vsub.s32 0, %v1522
  %v1524 = vrot.slane %v1519, %v1523
  %v1526 = vadd.f32 %v1455, %v1524
  %v1527 = vadd.f32 %v1464, %v1524
  %v1528 = vadd.f32 %v1473, %v1524
  %v1529 = vadd.f32 %v1482, %v1524
  %v1530 = vadd.f32 %v1491, %v1524
  %v1531 = vadd.f32 %v1500, %v1524
  %v1532 = vadd.f32 %v1509, %v1524
  %v1533 = vadd.f32 %v1518, %v1524
  %v1542 = vrot.slane %v1527, 7
  %vm1543 = vcmask 1041409
  %v1544 = vsel %vm1543, %v1542, %v1526
  %v1545 = vrot.slane %v1528, 6
  %vm1546 = vcmask 1042434
  %v1547 = vsel %vm1546, %v1545, %v1544
  %v1548 = vrot.slane %v1529, 5
  %vm1549 = vcmask 1043459
  %v1550 = vsel %vm1549, %v1548, %v1547
  %v1551 = vrot.slane %v1530, 4
  %vm1552 = vcmask 1044484
  %v1553 = vsel %vm1552, %v1551, %v1550
  %v1554 = vrot.slane %v1531, 3
  %vm1555 = vcmask 1045509
  %v1556 = vsel %vm1555, %v1554, %v1553
  %v1557 = vrot.slane %v1532, 2
  %vm1558 = vcmask 1046534
  %v1559 = vsel %vm1558, %v1557, %v1556
  %v1560 = vrot.slane %v1533, 1
  %vm1561 = vcmask 1047559
  %v1562 = vsel %vm1561, %v1560, %v1559
  %1564 = vst.msk [vmem:[%s11] sm:$0xff] %vm1446, %v1562
  // Predicated region
  $region46: #{tpu_custom_call.1} parent=0 // pred_check
    _
  $region47: #{tpu_custom_call.1} parent=0 // pred_check_branch
    %1566 = sbr.rel (0) target = $region49
  $region48: #{tpu_custom_call.1} parent=0 // pred_region
    _
  $region49: #{tpu_custom_call.1} parent=0 // pred_fallthru
    _
  // Predicated region
  $region50: #{tpu_custom_call.1} parent=0 // pred_check
    _
  $region51: #{tpu_custom_call.1} parent=0 // pred_check_branch
    %1568 = sbr.rel (0) target = $region53
  $region52: #{tpu_custom_call.1} parent=0 // pred_region
    _
  $region53: #{tpu_custom_call.1} parent=0 // pred_fallthru
    _

</llo_original>
